<compile_context>
chip_gen: v7x
topology: tpu7x:2x2x1
jax: 0.10.0
libtpu: 0.0.40
codegen_flags: <defaults>
</compile_context>

<pallas_src>
import jax
import jax.numpy as jnp
from jax import lax
from jax.experimental import pallas as pl
from jax.experimental.pallas import tpu as pltpu

IN_DIM = 768           # hardcoded in the module (Linear(768, intermediate_dim))
INTER_DIM = 256        # intermediate_dim (kept small/lane-aligned for the test)
NUM_FC_LAYERS = 2      # num_fc_layers
NUM_TIMESTEPS = 100    # denoising_time_steps
MAX_BATCH_TILE = 512   # rows per grid step (review: 512-1024; 512 leaves VMEM headroom)


def _round_up(n, m):
    return ((n + m - 1) // m) * m


def diffusion_fc_kernel(x_ref, t_ref, temb_tbl_ref,
                        w_in_ref,
                        w_mid0_ref, b_mid0_ref,
                        w_mid1_ref, b_mid1_ref,
                        w_out_ref, b_out_ref,
                        o_ref):
    tm = x_ref.shape[0]
    t_pad = temb_tbl_ref.shape[0]

    # f32 -> bf16 cast of the activations done in-kernel (hidden under MXU)
    # instead of as a separate full-array XLA op in the wrapper.
    x_bf = x_ref[...].astype(jnp.bfloat16)

    # In-kernel embedding lookup: one-hot(t) @ table runs on the MXU and avoids
    # materializing/re-reading a (B, D) gathered array in HBM. The table
    # already has b_in folded in, so this also supplies the first-layer bias.
    t_idx = t_ref[...]                                          # (tm, 1) int32
    iota = lax.broadcasted_iota(jnp.int32, (tm, t_pad), 1)
    onehot = (iota == t_idx).astype(jnp.bfloat16)               # (tm, t_pad)
    t_embed = jnp.dot(onehot, temb_tbl_ref[...],
                      preferred_element_type=jnp.float32)       # (tm, D) f32

    # Linear(768 -> D) + (b_in + time embedding) (bf16 operands, f32 accum).
    h = jnp.dot(x_bf, w_in_ref[...],
                preferred_element_type=jnp.float32) + t_embed
    # MidFC layer 0: Linear(D, D) -> ReLU
    h = jnp.maximum(
        jnp.dot(h.astype(jnp.bfloat16), w_mid0_ref[...],
                preferred_element_type=jnp.float32) + b_mid0_ref[...], 0.0)
    # MidFC layer 1: Linear(D, D) -> ReLU
    h = jnp.maximum(
        jnp.dot(h.astype(jnp.bfloat16), w_mid1_ref[...],
                preferred_element_type=jnp.float32) + b_mid1_ref[...], 0.0)
    # Linear(D -> 768)
    o_ref[...] = (jnp.dot(h.astype(jnp.bfloat16), w_out_ref[...],
                          preferred_element_type=jnp.float32)
                  + b_out_ref[...]).astype(o_ref.dtype)


def prepare_params(params):
    """One-time weight prep (call OUTSIDE the hot loop): bf16 casts, pad the
    timestep table to a 128-multiple of rows, and fold b_in into the table."""
    T, _ = params["time_embed"].shape
    Tp = _round_up(T, 128)
    tbl = params["time_embed"] + params["b_in"]      # fold b_in into the table
    tbl = jnp.pad(tbl, ((0, Tp - T), (0, 0))).astype(jnp.bfloat16)
    return {
        "temb_tbl": tbl,
        "w_in":   params["w_in"].astype(jnp.bfloat16),
        "w_mid0": params["w_mid0"].astype(jnp.bfloat16),
        "b_mid0": params["b_mid0"],
        "w_mid1": params["w_mid1"].astype(jnp.bfloat16),
        "b_mid1": params["b_mid1"],
        "w_out":  params["w_out"].astype(jnp.bfloat16),
        "b_out":  params["b_out"],
    }


@jax.jit
def diffusion_fc_forward(x, t, prep):
    """x: (B, 768) f32, t: (B,) int32 timestep indices. prep = prepare_params(...)."""
    B = x.shape[0]
    D = prep["w_in"].shape[1]
    Tp = prep["temb_tbl"].shape[0]

    # Adaptive batch tiling: split B as evenly as possible into tiles of at
    # most MAX_BATCH_TILE rows, each a multiple of 16 (full bf16 sublane
    # groups). Pad waste in the last tile is therefore < 16 rows per tile.
    num_tiles = pl.cdiv(B, MAX_BATCH_TILE)
    bt = _round_up(pl.cdiv(B, num_tiles), 16)
    Bp = bt * num_tiles
    if Bp != B:
        x = jnp.pad(x, ((0, Bp - B), (0, 0)))
        t = jnp.pad(t, (0, Bp - B))          # pads with index 0; rows sliced off
    t2 = t.astype(jnp.int32).reshape(Bp, 1)
    # NOTE: t in [NUM_TIMESTEPS, Tp) or negative silently yields a zero/padded
    # embedding rather than an error (add a wrapper assert if that can happen).

    grid = (num_tiles,)
    full = lambda shape: pl.BlockSpec(shape, lambda i: tuple(0 for _ in shape))

    flops = 2 * Bp * (Tp * D + IN_DIM * D + NUM_FC_LAYERS * D * D + D * IN_DIM)
    bytes_accessed = (x.size * 4 + t2.size * 4 + Bp * IN_DIM * 4
                      + prep["temb_tbl"].size * 2
                      + (prep["w_in"].size + prep["w_mid0"].size
                         + prep["w_mid1"].size + prep["w_out"].size) * 2
                      + (2 * D + IN_DIM) * 4)

    out = pl.pallas_call(
        diffusion_fc_kernel,
        out_shape=jax.ShapeDtypeStruct((Bp, IN_DIM), jnp.float32),
        grid_spec=pltpu.PrefetchScalarGridSpec(
            num_scalar_prefetch=0,
            grid=grid,
            in_specs=[
                pl.BlockSpec((bt, IN_DIM), lambda i: (i, 0)),   # x tile (f32)
                pl.BlockSpec((bt, 1), lambda i: (i, 0)),        # t tile
                full((Tp, D)),       # time_embed table (+ b_in), VMEM resident
                full((IN_DIM, D)),   # w_in
                full((D, D)),        # w_mid0
                full((1, D)),        # b_mid0
                full((D, D)),        # w_mid1
                full((1, D)),        # b_mid1
                full((D, IN_DIM)),   # w_out
                full((1, IN_DIM)),   # b_out
            ],
            out_specs=pl.BlockSpec((bt, IN_DIM), lambda i: (i, 0)),
        ),
        compiler_params=pltpu.CompilerParams(
            dimension_semantics=("parallel",)),   # shards across v7x TCs
        cost_estimate=pl.CostEstimate(
            flops=flops, transcendentals=0, bytes_accessed=bytes_accessed),
    )(x, t2, prep["temb_tbl"],
      prep["w_in"],
      prep["w_mid0"], prep["b_mid0"],
      prep["w_mid1"], prep["b_mid1"],
      prep["w_out"], prep["b_out"])
    return out[:B]


def init_params(key, inter_dim=INTER_DIM):
    keys = jax.random.split(key, 10)

    def lin(kw, fan_in, fan_out):
        scale = 1.0 / jnp.sqrt(fan_in)
        return jax.random.normal(kw, (fan_in, fan_out), jnp.float32) * scale

    return {
        "time_embed": jax.random.normal(keys[0], (NUM_TIMESTEPS, inter_dim),
                                        jnp.float32),
        "w_in":  lin(keys[1], IN_DIM, inter_dim),
        "b_in":  jax.random.normal(keys[2], (1, inter_dim), jnp.float32) * 0.01,
        "w_mid0": lin(keys[3], inter_dim, inter_dim),
        "b_mid0": jax.random.normal(keys[4], (1, inter_dim), jnp.float32) * 0.01,
        "w_mid1": lin(keys[5], inter_dim, inter_dim),
        "b_mid1": jax.random.normal(keys[6], (1, inter_dim), jnp.float32) * 0.01,
        "w_out": lin(keys[7], inter_dim, IN_DIM),
        "b_out": jax.random.normal(keys[8], (1, IN_DIM), jnp.float32) * 0.01,
    }


def reference_forward(x, t, params):
    t_embed = jnp.take(params["time_embed"], t, axis=0)
    h = x @ params["w_in"] + params["b_in"] + t_embed
    h = jnp.maximum(h @ params["w_mid0"] + params["b_mid0"], 0.0)
    h = jnp.maximum(h @ params["w_mid1"] + params["b_mid1"], 0.0)
    return h @ params["w_out"] + params["b_out"]


if __name__ == "__main__":
    key = jax.random.PRNGKey(0)
    k_p, k_x, k_t = jax.random.split(key, 3)

    B = 12  # deliberately not a multiple of the tile to exercise the pad path
    params = init_params(k_p)
    prep = prepare_params(params)   # one-time weight prep, outside the hot loop
    x = jax.random.normal(k_x, (B, IN_DIM), jnp.float32)
    t = jax.random.randint(k_t, (B,), 0, NUM_TIMESTEPS, jnp.int32)

    y = diffusion_fc_forward(x, t, prep)
    y = jax.block_until_ready(y)

    y_ref = reference_forward(x, t, params)
    assert y.shape == (B, IN_DIM)
    # bf16 operands / f32 accumulation: relaxed tolerance vs. the f32 reference.
    assert jnp.allclose(y, y_ref, atol=5e-2, rtol=5e-2), float(
        jnp.max(jnp.abs(y - y_ref)))

    print("KERNEL_OK")
</pallas_src>

<mosaic_0001>
module attributes {stable_mosaic.version = 11 : i64} {
  func.func @diffusion_fc_kernel(%arg0: i32, %arg1: memref<16x768xf32, #tpu.memory_space<vmem>>, %arg2: memref<16x1xi32, #tpu.memory_space<vmem>>, %arg3: memref<128x256xbf16, #tpu.memory_space<vmem>>, %arg4: memref<768x256xbf16, #tpu.memory_space<vmem>>, %arg5: memref<256x256xbf16, #tpu.memory_space<vmem>>, %arg6: memref<1x256xf32, #tpu.memory_space<vmem>>, %arg7: memref<256x256xbf16, #tpu.memory_space<vmem>>, %arg8: memref<1x256xf32, #tpu.memory_space<vmem>>, %arg9: memref<256x768xbf16, #tpu.memory_space<vmem>>, %arg10: memref<1x768xf32, #tpu.memory_space<vmem>>, %arg11: memref<16x768xf32, #tpu.memory_space<vmem>>) attributes {dimension_semantics = [#tpu.dimension_semantics<parallel>], iteration_bounds = array<i64: 1>, scalar_prefetch = 0 : i64, scratch_operands = 0 : i64, tpu.core_type = #tpu.core_type<tc>, window_params = [{transform_indices = @transform_0, window_bounds = array<i64: 16, 768>}, {transform_indices = @transform_1, window_bounds = array<i64: 16, 1>}, {pipeline_mode = #tpu.pipeline_mode<synchronous>, transform_indices = @transform_2, window_bounds = array<i64: 128, 256>}, {pipeline_mode = #tpu.pipeline_mode<synchronous>, transform_indices = @transform_3, window_bounds = array<i64: 768, 256>}, {pipeline_mode = #tpu.pipeline_mode<synchronous>, transform_indices = @transform_4, window_bounds = array<i64: 256, 256>}, {pipeline_mode = #tpu.pipeline_mode<synchronous>, transform_indices = @transform_5, window_bounds = array<i64: 1, 256>}, {pipeline_mode = #tpu.pipeline_mode<synchronous>, transform_indices = @transform_6, window_bounds = array<i64: 256, 256>}, {pipeline_mode = #tpu.pipeline_mode<synchronous>, transform_indices = @transform_7, window_bounds = array<i64: 1, 256>}, {pipeline_mode = #tpu.pipeline_mode<synchronous>, transform_indices = @transform_8, window_bounds = array<i64: 256, 768>}, {pipeline_mode = #tpu.pipeline_mode<synchronous>, transform_indices = @transform_9, window_bounds = array<i64: 1, 768>}, {transform_indices = @transform_10, window_bounds = array<i64: 16, 768>}]} {
    %c0 = arith.constant 0 : index
    %c0_0 = arith.constant 0 : index
    %0 = vector.load %arg1[%c0, %c0_0] : memref<16x768xf32, #tpu.memory_space<vmem>>, vector<16x768xf32>
    %1 = arith.truncf %0 : vector<16x768xf32> to vector<16x768xbf16>
    %c0_1 = arith.constant 0 : index
    %c0_2 = arith.constant 0 : index
    %2 = vector.load %arg2[%c0_1, %c0_2] : memref<16x1xi32, #tpu.memory_space<vmem>>, vector<16x1xi32>
    %3 = tpu.iota {dimensions = array<i32: 1>} : vector<16x128xi32>
    %4 = vector.broadcast %2 : vector<16x1xi32> to vector<16x128xi32>
    %5 = arith.cmpi eq, %3, %4 : vector<16x128xi32>
    %6 = arith.extui %5 : vector<16x128xi1> to vector<16x128xi32>
    %7 = arith.sitofp %6 : vector<16x128xi32> to vector<16x128xf32>
    %8 = arith.truncf %7 : vector<16x128xf32> to vector<16x128xbf16>
    %c0_3 = arith.constant 0 : index
    %c0_4 = arith.constant 0 : index
    %9 = vector.load %arg3[%c0_3, %c0_4] : memref<128x256xbf16, #tpu.memory_space<vmem>>, vector<128x256xbf16>
    %cst = arith.constant dense<0.000000e+00> : vector<16x256xf32>
    %10 = tpu.matmul %8, %9, %cst {dimension_numbers = #tpu.dot_dimension_numbers<[1], [0], [0], [1], [0, 0, 1, 1], [], []>} : vector<16x128xbf16>, vector<128x256xbf16>, vector<16x256xf32> -> vector<16x256xf32>
    %c0_5 = arith.constant 0 : index
    %c0_6 = arith.constant 0 : index
    %11 = vector.load %arg4[%c0_5, %c0_6] : memref<768x256xbf16, #tpu.memory_space<vmem>>, vector<768x256xbf16>
    %cst_7 = arith.constant dense<0.000000e+00> : vector<16x256xf32>
    %12 = tpu.matmul %1, %11, %cst_7 {dimension_numbers = #tpu.dot_dimension_numbers<[1], [0], [0], [1], [0, 0, 1, 1], [], []>} : vector<16x768xbf16>, vector<768x256xbf16>, vector<16x256xf32> -> vector<16x256xf32>
    %13 = arith.addf %12, %10 : vector<16x256xf32>
    %14 = arith.truncf %13 : vector<16x256xf32> to vector<16x256xbf16>
    %c0_8 = arith.constant 0 : index
    %c0_9 = arith.constant 0 : index
    %15 = vector.load %arg5[%c0_8, %c0_9] : memref<256x256xbf16, #tpu.memory_space<vmem>>, vector<256x256xbf16>
    %cst_10 = arith.constant dense<0.000000e+00> : vector<16x256xf32>
    %16 = tpu.matmul %14, %15, %cst_10 {dimension_numbers = #tpu.dot_dimension_numbers<[1], [0], [0], [1], [0, 0, 1, 1], [], []>} : vector<16x256xbf16>, vector<256x256xbf16>, vector<16x256xf32> -> vector<16x256xf32>
    %c0_11 = arith.constant 0 : index
    %c0_12 = arith.constant 0 : index
    %17 = vector.load %arg6[%c0_11, %c0_12] : memref<1x256xf32, #tpu.memory_space<vmem>>, vector<1x256xf32>
    %18 = vector.broadcast %17 : vector<1x256xf32> to vector<16x256xf32>
    %19 = arith.addf %16, %18 : vector<16x256xf32>
    %cst_13 = arith.constant 0.000000e+00 : f32
    %20 = vector.broadcast %cst_13 : f32 to vector<16x256xf32>
    %21 = arith.maximumf %19, %20 : vector<16x256xf32>
    %22 = arith.truncf %21 : vector<16x256xf32> to vector<16x256xbf16>
    %c0_14 = arith.constant 0 : index
    %c0_15 = arith.constant 0 : index
    %23 = vector.load %arg7[%c0_14, %c0_15] : memref<256x256xbf16, #tpu.memory_space<vmem>>, vector<256x256xbf16>
    %cst_16 = arith.constant dense<0.000000e+00> : vector<16x256xf32>
    %24 = tpu.matmul %22, %23, %cst_16 {dimension_numbers = #tpu.dot_dimension_numbers<[1], [0], [0], [1], [0, 0, 1, 1], [], []>} : vector<16x256xbf16>, vector<256x256xbf16>, vector<16x256xf32> -> vector<16x256xf32>
    %c0_17 = arith.constant 0 : index
    %c0_18 = arith.constant 0 : index
    %25 = vector.load %arg8[%c0_17, %c0_18] : memref<1x256xf32, #tpu.memory_space<vmem>>, vector<1x256xf32>
    %26 = vector.broadcast %25 : vector<1x256xf32> to vector<16x256xf32>
    %27 = arith.addf %24, %26 : vector<16x256xf32>
    %cst_19 = arith.constant 0.000000e+00 : f32
    %28 = vector.broadcast %cst_19 : f32 to vector<16x256xf32>
    %29 = arith.maximumf %27, %28 : vector<16x256xf32>
    %30 = arith.truncf %29 : vector<16x256xf32> to vector<16x256xbf16>
    %c0_20 = arith.constant 0 : index
    %c0_21 = arith.constant 0 : index
    %31 = vector.load %arg9[%c0_20, %c0_21] : memref<256x768xbf16, #tpu.memory_space<vmem>>, vector<256x768xbf16>
    %cst_22 = arith.constant dense<0.000000e+00> : vector<16x768xf32>
    %32 = tpu.matmul %30, %31, %cst_22 {dimension_numbers = #tpu.dot_dimension_numbers<[1], [0], [0], [1], [0, 0, 1, 1], [], []>} : vector<16x256xbf16>, vector<256x768xbf16>, vector<16x768xf32> -> vector<16x768xf32>
    %c0_23 = arith.constant 0 : index
    %c0_24 = arith.constant 0 : index
    %33 = vector.load %arg10[%c0_23, %c0_24] : memref<1x768xf32, #tpu.memory_space<vmem>>, vector<1x768xf32>
    %34 = vector.broadcast %33 : vector<1x768xf32> to vector<16x768xf32>
    %35 = arith.addf %32, %34 : vector<16x768xf32>
    %c0_25 = arith.constant 0 : index
    %c0_26 = arith.constant 0 : index
    %36 = vector.load %arg11[%c0_25, %c0_26] : memref<16x768xf32, #tpu.memory_space<vmem>>, vector<16x768xf32>
    tpu.vector_store %arg11[%c0_25, %c0_26], %35 {strides = array<i32>} : memref<16x768xf32, #tpu.memory_space<vmem>>, vector<16x768xf32>,
    return
  }
  func.func @transform_0(%arg0: i32) -> (i32, i32) {
    %c0_i32 = arith.constant 0 : i32
    %c0_i32_0 = arith.constant 0 : i32
    return %arg0, %c0_i32 : i32, i32
  }
  func.func @transform_1(%arg0: i32) -> (i32, i32) {
    %c0_i32 = arith.constant 0 : i32
    %c0_i32_0 = arith.constant 0 : i32
    return %arg0, %c0_i32 : i32, i32
  }
  func.func @transform_2(%arg0: i32) -> (i32, i32) {
    %c0_i32 = arith.constant 0 : i32
    %c0_i32_0 = arith.constant 0 : i32
    %c0_i32_1 = arith.constant 0 : i32
    return %c0_i32, %c0_i32_0 : i32, i32
  }
  func.func @transform_3(%arg0: i32) -> (i32, i32) {
    %c0_i32 = arith.constant 0 : i32
    %c0_i32_0 = arith.constant 0 : i32
    %c0_i32_1 = arith.constant 0 : i32
    return %c0_i32, %c0_i32_0 : i32, i32
  }
  func.func @transform_4(%arg0: i32) -> (i32, i32) {
    %c0_i32 = arith.constant 0 : i32
    %c0_i32_0 = arith.constant 0 : i32
    %c0_i32_1 = arith.constant 0 : i32
    return %c0_i32, %c0_i32_0 : i32, i32
  }
  func.func @transform_5(%arg0: i32) -> (i32, i32) {
    %c0_i32 = arith.constant 0 : i32
    %c0_i32_0 = arith.constant 0 : i32
    %c0_i32_1 = arith.constant 0 : i32
    return %c0_i32, %c0_i32_0 : i32, i32
  }
  func.func @transform_6(%arg0: i32) -> (i32, i32) {
    %c0_i32 = arith.constant 0 : i32
    %c0_i32_0 = arith.constant 0 : i32
    %c0_i32_1 = arith.constant 0 : i32
    return %c0_i32, %c0_i32_0 : i32, i32
  }
  func.func @transform_7(%arg0: i32) -> (i32, i32) {
    %c0_i32 = arith.constant 0 : i32
    %c0_i32_0 = arith.constant 0 : i32
    %c0_i32_1 = arith.constant 0 : i32
    return %c0_i32, %c0_i32_0 : i32, i32
  }
  func.func @transform_8(%arg0: i32) -> (i32, i32) {
    %c0_i32 = arith.constant 0 : i32
    %c0_i32_0 = arith.constant 0 : i32
    %c0_i32_1 = arith.constant 0 : i32
    return %c0_i32, %c0_i32_0 : i32, i32
  }
  func.func @transform_9(%arg0: i32) -> (i32, i32) {
    %c0_i32 = arith.constant 0 : i32
    %c0_i32_0 = arith.constant 0 : i32
    %c0_i32_1 = arith.constant 0 : i32
    return %c0_i32, %c0_i32_0 : i32, i32
  }
  func.func @transform_10(%arg0: i32) -> (i32, i32) {
    %c0_i32 = arith.constant 0 : i32
    %c0_i32_0 = arith.constant 0 : i32
    return %arg0, %c0_i32 : i32, i32
  }
}

</mosaic_0001>

<llo_original>
// kernel: diffusion_fc_forward.1
$region0: #{diffusion_fc_forward.1}
  #allocation0 [shape = 'u32[]', space=smem, size = 0x4, offset = 0x4, fixed_abs, tag = 'smem constant byte address 0x4 - core index']
  #allocation1 [shape = 'u32[144,128]{1,0:T(1,128)}', space=vmem, size = 0x12000, scoped, tag = 'internal scratch']
  %s0 = inlined_call_operand.vmem [shape: f32[16,768], index: 0, kind: input, shape index: {}]
  %s1 = inlined_call_operand.vmem [shape: s32[16,1], index: 1, kind: input, shape index: {}]
  %s2 = inlined_call_operand.vmem [shape: bf16[128,256], index: 2, kind: input, shape index: {}]
  %s3 = inlined_call_operand.hbm [shape: bf16[768,256], index: 3, kind: input, shape index: {}]
  %s4 = inlined_call_operand.hbm [shape: bf16[256,256], index: 4, kind: input, shape index: {}]
  %s5 = inlined_call_operand.vmem [shape: f32[1,256], index: 5, kind: input, shape index: {}]
  %s6 = inlined_call_operand.hbm [shape: bf16[256,256], index: 6, kind: input, shape index: {}]
  %s7 = inlined_call_operand.vmem [shape: f32[1,256], index: 7, kind: input, shape index: {}]
  %s8 = inlined_call_operand.hbm [shape: bf16[256,768], index: 8, kind: input, shape index: {}]
  %s9 = inlined_call_operand.vmem [shape: f32[1,768], index: 9, kind: input, shape index: {}]
  %s10 = inlined_call_operand.hbm [shape: f32[16,768], index: 10, kind: output, shape index: {}]
  %s11 = sld [smem:[#allocation0]]
  $region66: #{diffusion_fc_forward.1} parent=0
    _
  %s13 = ssub.s32 1, %s11
  %s14 = scalar_select 0, %s13, %s11
  $region1: #{diffusion_fc_forward.1} parent=0
    #allocation2 [shape = 'u8[393216]{0}', space=vmem, size = 0x60000, scoped, tag = 'input window, operand 3, single buffered']
    #allocation3 [shape = 's32[1]{0}', space=sflag, size = 0x4, scoped, tag = 'scoped memory for diffusion_fc_forward.1']
    #allocation4 [shape = 's32[1]{0}', space=sflag, size = 0x4, scoped, tag = 'scoped memory for diffusion_fc_forward.1']
    #allocation5 [shape = 'u8[131072]{0}', space=vmem, size = 0x20000, scoped, tag = 'input window, operand 4, single buffered']
    #allocation6 [shape = 's32[1]{0}', space=sflag, size = 0x4, scoped, tag = 'scoped memory for diffusion_fc_forward.1']
    #allocation7 [shape = 'u8[131072]{0}', space=vmem, size = 0x20000, scoped, tag = 'input window, operand 6, single buffered']
    #allocation8 [shape = 'u8[393216]{0}', space=vmem, size = 0x60000, scoped, tag = 'input window, operand 8, single buffered']
    #allocation9 [shape = 's32[1]{0}', space=sflag, size = 0x4, scoped, tag = 'scoped memory for diffusion_fc_forward.1']
    #allocation10 [shape = 'u8[49152]{0}', space=vmem, size = 0xc000, scoped, tag = 'output window, operand 0, single buffered']
    %15 = vsyncpa [#allocation3], 0
    %16 = vsyncpa [#allocation6], 0
    %17 = vsyncpa [#allocation9], 0
    %18 = vsyncpa [#allocation4], 0
    // Predicated region
    $region2: #{diffusion_fc_forward.1} parent=1 // pred_check
      _
    $region3: #{diffusion_fc_forward.1} parent=1 // pred_check_branch
      %20 = sbr.rel (0) target = $region5
    $region4: #{diffusion_fc_forward.1} parent=1 // pred_region
      _
    $region5: #{diffusion_fc_forward.1} parent=1 // pred_fallthru
      _
    // Predicated region
    $region6: #{diffusion_fc_forward.1} parent=1 // pred_check
      _
    $region7: #{diffusion_fc_forward.1} parent=1 // pred_check_branch
      %22 = sbr.rel (0) target = $region9
    $region8: #{diffusion_fc_forward.1} parent=1 // pred_region
      _
    $region9: #{diffusion_fc_forward.1} parent=1 // pred_fallthru
      _
    // Predicated region
    $region10: #{diffusion_fc_forward.1} parent=1 // pred_check
      _
    $region11: #{diffusion_fc_forward.1} parent=1 // pred_check_branch
      %24 = sbr.rel (0) target = $region13
    $region12: #{diffusion_fc_forward.1} parent=1 // pred_region
      _
    $region13: #{diffusion_fc_forward.1} parent=1 // pred_fallthru
      _
    // Predicated region
    $region14: #{diffusion_fc_forward.1} parent=1 // pred_check
      _
    $region15: #{diffusion_fc_forward.1} parent=1 // pred_check_branch
      %26 = sbr.rel (0) target = $region17
    $region16: #{diffusion_fc_forward.1} parent=1 // pred_region
      %s28 = ssub.s32 12288, 12288
      %29 = vsyncadd [#allocation3], %s28
      %s30 = sshll.u32 [#allocation2], 4
      %s31 = int_to_ptr.vmem [resolvable:$true] %s30
      %36 = dma.hbm_to_vmem [thread:$0]  %s3, 12288, %s31, [#allocation3], 128, 128, 8
    $region17: #{diffusion_fc_forward.1} parent=1 // pred_fallthru
      _
    // Predicated region
    $region18: #{diffusion_fc_forward.1} parent=1 // pred_check
      _
    $region19: #{diffusion_fc_forward.1} parent=1 // pred_check_branch
      %38 = sbr.rel (0) target = $region21
    $region20: #{diffusion_fc_forward.1} parent=1 // pred_region
      %s40 = ssub.s32 4096, 4096
      %41 = vsyncadd [#allocation6], %s40
      %s42 = sshll.u32 [#allocation5], 4
      %s43 = int_to_ptr.vmem [resolvable:$true] %s42
      %48 = dma.hbm_to_vmem [thread:$0]  %s4, 4096, %s43, [#allocation6], 128, 128, 8
    $region21: #{diffusion_fc_forward.1} parent=1 // pred_fallthru
      _
    // Predicated region
    $region22: #{diffusion_fc_forward.1} parent=1 // pred_check
      _
    $region23: #{diffusion_fc_forward.1} parent=1 // pred_check_branch
      %50 = sbr.rel (0) target = $region25
    $region24: #{diffusion_fc_forward.1} parent=1 // pred_region
      _
    $region25: #{diffusion_fc_forward.1} parent=1 // pred_fallthru
      _
    // Predicated region
    $region26: #{diffusion_fc_forward.1} parent=1 // pred_check
      _
    $region27: #{diffusion_fc_forward.1} parent=1 // pred_check_branch
      %52 = sbr.rel (0) target = $region29
    $region28: #{diffusion_fc_forward.1} parent=1 // pred_region
      %s54 = ssub.s32 4096, 4096
      %55 = vsyncadd [#allocation6], %s54
      %s56 = sshll.u32 [#allocation7], 4
      %s57 = int_to_ptr.vmem [resolvable:$true] %s56
      %62 = dma.hbm_to_vmem [thread:$0]  %s6, 4096, %s57, [#allocation6], 128, 128, 8
    $region29: #{diffusion_fc_forward.1} parent=1 // pred_fallthru
      _
    // Predicated region
    $region30: #{diffusion_fc_forward.1} parent=1 // pred_check
      _
    $region31: #{diffusion_fc_forward.1} parent=1 // pred_check_branch
      %64 = sbr.rel (0) target = $region33
    $region32: #{diffusion_fc_forward.1} parent=1 // pred_region
      _
    $region33: #{diffusion_fc_forward.1} parent=1 // pred_fallthru
      _
    // Predicated region
    $region34: #{diffusion_fc_forward.1} parent=1 // pred_check
      _
    $region35: #{diffusion_fc_forward.1} parent=1 // pred_check_branch
      %66 = sbr.rel (0) target = $region37
    $region36: #{diffusion_fc_forward.1} parent=1 // pred_region
      %s68 = ssub.s32 12288, 12288
      %69 = vsyncadd [#allocation9], %s68
      %s70 = sshll.u32 [#allocation8], 4
      %s71 = int_to_ptr.vmem [resolvable:$true] %s70
      %76 = dma.hbm_to_vmem [thread:$0]  %s8, 12288, %s71, [#allocation9], 384, 384, 24
    $region37: #{diffusion_fc_forward.1} parent=1 // pred_fallthru
      _
    // Predicated region
    $region38: #{diffusion_fc_forward.1} parent=1 // pred_check
      _
    $region39: #{diffusion_fc_forward.1} parent=1 // pred_check_branch
      %78 = sbr.rel (0) target = $region41
    $region40: #{diffusion_fc_forward.1} parent=1 // pred_region
      _
    $region41: #{diffusion_fc_forward.1} parent=1 // pred_fallthru
      _
    // Predicated region
    $region42: #{diffusion_fc_forward.1} parent=1 // pred_check
      _
    $region43: #{diffusion_fc_forward.1} parent=1 // pred_check_branch
      %80 = sbr.rel (0) target = $region45
    $region44: #{diffusion_fc_forward.1} parent=1 // pred_region
      %81 = dma.done [#allocation3], 12288
    $region45: #{diffusion_fc_forward.1} parent=1 // pred_fallthru
      _
    // Predicated region
    $region46: #{diffusion_fc_forward.1} parent=1 // pred_check
      _
    $region47: #{diffusion_fc_forward.1} parent=1 // pred_check_branch
      %83 = sbr.rel (0) target = $region49
    $region48: #{diffusion_fc_forward.1} parent=1 // pred_region
      %84 = dma.done [#allocation6], 4096
    $region49: #{diffusion_fc_forward.1} parent=1 // pred_fallthru
      _
    // Predicated region
    $region50: #{diffusion_fc_forward.1} parent=1 // pred_check
      _
    $region51: #{diffusion_fc_forward.1} parent=1 // pred_check_branch
      %86 = sbr.rel (0) target = $region53
    $region52: #{diffusion_fc_forward.1} parent=1 // pred_region
      %87 = dma.done [#allocation6], 4096
    $region53: #{diffusion_fc_forward.1} parent=1 // pred_fallthru
      _
    // Predicated region
    $region54: #{diffusion_fc_forward.1} parent=1 // pred_check
      _
    $region55: #{diffusion_fc_forward.1} parent=1 // pred_check_branch
      %89 = sbr.rel (0) target = $region57
    $region56: #{diffusion_fc_forward.1} parent=1 // pred_region
      %90 = dma.done [#allocation9], 12288
    $region57: #{diffusion_fc_forward.1} parent=1 // pred_fallthru
      _
    %v92 = vld [vmem:[%s0] sm:$0xff]
    %v93 = vld [vmem:[%s0 + $0x8] sm:$0xff]
    %v94 = vld [vmem:[%s0 + $0x10] sm:$0xff]
    %v95 = vld [vmem:[%s0 + $0x18] sm:$0xff]
    %v96 = vld [vmem:[%s0 + $0x20] sm:$0xff]
    %v97 = vld [vmem:[%s0 + $0x28] sm:$0xff]
    %v98 = vld [vmem:[%s0 + $0x30] sm:$0xff]
    %v99 = vld [vmem:[%s0 + $0x38] sm:$0xff]
    %v100 = vld [vmem:[%s0 + $0x40] sm:$0xff]
    %v101 = vld [vmem:[%s0 + $0x48] sm:$0xff]
    %v102 = vld [vmem:[%s0 + $0x50] sm:$0xff]
    %v103 = vld [vmem:[%s0 + $0x58] sm:$0xff]
    %v104 = vpack.c.bf16 %v98, %v92
    %v105 = vpack.c.bf16 %v99, %v93
    %v106 = vpack.c.bf16 %v100, %v94
    %v107 = vpack.c.bf16 %v101, %v95
    %v108 = vpack.c.bf16 %v102, %v96
    %v109 = vpack.c.bf16 %v103, %v97
    %v110 = vld [vmem:[%s1] sm:$0xff]
    %v111 = vld [vmem:[%s1 + $0x8] sm:$0xff]
    %v112 = vlaneseq
    %v113 = vand.u32 %v112, 127
    %114 = vset.pattern.permute.xlu0 0
    %115 = vperm.xlu0 %114, %v110
    %v116 = vpop.permute.xlu0 %115
    %117 = vset.pattern.permute.xlu0 0
    %118 = vperm.xlu0 %117, %v111
    %v119 = vpop.permute.xlu0 %118
    %vm120 = vcmp.eq.s32.totalorder %v113, %v116
    %vm121 = vcmp.eq.s32.totalorder %v113, %v119
    %v122 = vsel %vm120, 1, 0
    %v123 = vsel %vm121, 1, 0
    %v124 = vcvt.s32.f32 %v122
    %v125 = vcvt.s32.f32 %v123
    %v126 = vpack.c.bf16 %v125, %v124
    %v127 = vld [vmem:[%s2] sm:$0xff]
    %v128 = vld [vmem:[%s2 + $0x8] sm:$0xff]
    %v129 = vld [vmem:[%s2 + $0x10] sm:$0xff]
    %v130 = vld [vmem:[%s2 + $0x18] sm:$0xff]
    %v131 = vld [vmem:[%s2 + $0x20] sm:$0xff]
    %v132 = vld [vmem:[%s2 + $0x28] sm:$0xff]
    %v133 = vld [vmem:[%s2 + $0x30] sm:$0xff]
    %v134 = vld [vmem:[%s2 + $0x38] sm:$0xff]
    %v135 = vld [vmem:[%s2 + $0x40] sm:$0xff]
    %v136 = vld [vmem:[%s2 + $0x48] sm:$0xff]
    %v137 = vld [vmem:[%s2 + $0x50] sm:$0xff]
    %v138 = vld [vmem:[%s2 + $0x58] sm:$0xff]
    %v139 = vld [vmem:[%s2 + $0x60] sm:$0xff]
    %v140 = vld [vmem:[%s2 + $0x68] sm:$0xff]
    %v141 = vld [vmem:[%s2 + $0x70] sm:$0xff]
    %v142 = vld [vmem:[%s2 + $0x78] sm:$0xff]
    %v159 = vunpack.c.l.b16 %v127
    %v160 = vunpack.c.h.b16 %v127
    %v161 = vunpack.c.l.b16 %v128
    %v162 = vunpack.c.h.b16 %v128
    %v163 = vunpack.c.l.b16 %v129
    %v164 = vunpack.c.h.b16 %v129
    %v165 = vunpack.c.l.b16 %v130
    %v166 = vunpack.c.h.b16 %v130
    %v167 = vunpack.c.l.b16 %v131
    %v168 = vunpack.c.h.b16 %v131
    %v169 = vunpack.c.l.b16 %v132
    %v170 = vunpack.c.h.b16 %v132
    %v171 = vunpack.c.l.b16 %v133
    %v172 = vunpack.c.h.b16 %v133
    %v173 = vunpack.c.l.b16 %v134
    %v174 = vunpack.c.h.b16 %v134
    %v175 = vunpack.c.l.b16 %v135
    %v176 = vunpack.c.h.b16 %v135
    %v177 = vunpack.c.l.b16 %v136
    %v178 = vunpack.c.h.b16 %v136
    %v179 = vunpack.c.l.b16 %v137
    %v180 = vunpack.c.h.b16 %v137
    %v181 = vunpack.c.l.b16 %v138
    %v182 = vunpack.c.h.b16 %v138
    %v183 = vunpack.c.l.b16 %v139
    %v184 = vunpack.c.h.b16 %v139
    %v185 = vunpack.c.l.b16 %v140
    %v186 = vunpack.c.h.b16 %v140
    %v187 = vunpack.c.l.b16 %v141
    %v188 = vunpack.c.h.b16 %v141
    %v189 = vunpack.c.l.b16 %v142
    %v190 = vunpack.c.h.b16 %v142
    %v191 = vpack.c.b16 %v161, %v159
    %v192 = vpack.c.b16 %v162, %v160
    %v193 = vpack.c.b16 %v165, %v163
    %v194 = vpack.c.b16 %v166, %v164
    %v195 = vpack.c.b16 %v169, %v167
    %v196 = vpack.c.b16 %v170, %v168
    %v197 = vpack.c.b16 %v173, %v171
    %v198 = vpack.c.b16 %v174, %v172
    %v199 = vpack.c.b16 %v177, %v175
    %v200 = vpack.c.b16 %v178, %v176
    %v201 = vpack.c.b16 %v181, %v179
    %v202 = vpack.c.b16 %v182, %v180
    %v203 = vpack.c.b16 %v185, %v183
    %v204 = vpack.c.b16 %v186, %v184
    %v205 = vpack.c.b16 %v189, %v187
    %v206 = vpack.c.b16 %v190, %v188
    %223 = vmatprep.subr.bf16.mxu0 %v192
    %224 = vmatpush1.bf16.msra.mxu0 %v191
    %225 = vmatprep.subr.bf16.mxu0 %v194
    %226 = vmatpush1.bf16.msra.mxu0 %v193
    %227 = vmatprep.subr.bf16.mxu0 %v196
    %228 = vmatpush1.bf16.msra.mxu0 %v195
    %229 = vmatprep.subr.bf16.mxu0 %v198
    %230 = vmatpush1.bf16.msra.mxu0 %v197
    %231 = vmatprep.subr.bf16.mxu0 %v200
    %232 = vmatpush1.bf16.msra.mxu0 %v199
    %233 = vmatprep.subr.bf16.mxu0 %v202
    %234 = vmatpush1.bf16.msra.mxu0 %v201
    %235 = vmatprep.subr.bf16.mxu0 %v204
    %236 = vmatpush1.bf16.msra.mxu0 %v203
    %237 = vmatprep.subr.bf16.mxu0 %v206
    %238 = vmatpush1.bf16.msra.mxu0 %v205
    %239 = vmatprep.subr.bf16.mxu0 0
    %240 = vmatpush1.bf16.msra.mxu0 0
    %241 = vmatprep.subr.bf16.mxu0 0
    %242 = vmatpush1.bf16.msra.mxu0 0
    %243 = vmatprep.subr.bf16.mxu0 0
    %244 = vmatpush1.bf16.msra.mxu0 0
    %245 = vmatprep.subr.bf16.mxu0 0
    %246 = vmatpush1.bf16.msra.mxu0 0
    %247 = vmatprep.subr.bf16.mxu0 0
    %248 = vmatpush1.bf16.msra.mxu0 0
    %249 = vmatprep.subr.bf16.mxu0 0
    %250 = vmatpush1.bf16.msra.mxu0 0
    %251 = vmatprep.subr.bf16.mxu0 0
    %252 = vmatpush1.bf16.msra.mxu0 0
    %253 = vmatprep.subr.bf16.mxu0 0
    %254 = vmatpush1.bf16.msra.mxu0 0
    %255 = vmatprep.mubr.bf16.mxu0 0
    %256 = vmatmul.mubr.bf16.gmra.mrb[0].mxu0 %v126
    %v257 = vpop.f32.mrb[0].mxu0
    %v258 = vadd.f32 0.0, %v257
    %v259 = vpop.f32.mrb[0].mxu0
    %v260 = vadd.f32 0.0, %v259
    %v261 = vpop.f32.mrb[0].mxu0
    %v262 = vadd.f32 0.0, %v261
    %v263 = vpop.f32.mrb[0].mxu0
    %v264 = vadd.f32 0.0, %v263
    %265 = vdwg.mxu0
    %v266 = vld [vmem:[#allocation2] sm:$0xff]
    %v267 = vld [vmem:[#allocation2 + $0x8] sm:$0xff]
    %v268 = vld [vmem:[#allocation2 + $0x10] sm:$0xff]
    %v269 = vld [vmem:[#allocation2 + $0x18] sm:$0xff]
    %v270 = vld [vmem:[#allocation2 + $0x20] sm:$0xff]
    %v271 = vld [vmem:[#allocation2 + $0x28] sm:$0xff]
    %v272 = vld [vmem:[#allocation2 + $0x30] sm:$0xff]
    %v273 = vld [vmem:[#allocation2 + $0x38] sm:$0xff]
    %v274 = vld [vmem:[#allocation2 + $0x40] sm:$0xff]
    %v275 = vld [vmem:[#allocation2 + $0x48] sm:$0xff]
    %v276 = vld [vmem:[#allocation2 + $0x50] sm:$0xff]
    %v277 = vld [vmem:[#allocation2 + $0x58] sm:$0xff]
    %v278 = vld [vmem:[#allocation2 + $0x60] sm:$0xff]
    %v279 = vld [vmem:[#allocation2 + $0x68] sm:$0xff]
    %v280 = vld [vmem:[#allocation2 + $0x70] sm:$0xff]
    %v281 = vld [vmem:[#allocation2 + $0x78] sm:$0xff]
    %v282 = vld [vmem:[#allocation2 + $0x80] sm:$0xff]
    %v283 = vld [vmem:[#allocation2 + $0x88] sm:$0xff]
    %v284 = vld [vmem:[#allocation2 + $0x90] sm:$0xff]
    %v285 = vld [vmem:[#allocation2 + $0x98] sm:$0xff]
    %v286 = vld [vmem:[#allocation2 + $0xa0] sm:$0xff]
    %v287 = vld [vmem:[#allocation2 + $0xa8] sm:$0xff]
    %v288 = vld [vmem:[#allocation2 + $0xb0] sm:$0xff]
    %v289 = vld [vmem:[#allocation2 + $0xb8] sm:$0xff]
    %v290 = vld [vmem:[#allocation2 + $0xc0] sm:$0xff]
    %v291 = vld [vmem:[#allocation2 + $0xc8] sm:$0xff]
    %v292 = vld [vmem:[#allocation2 + $0xd0] sm:$0xff]
    %v293 = vld [vmem:[#allocation2 + $0xd8] sm:$0xff]
    %v294 = vld [vmem:[#allocation2 + $0xe0] sm:$0xff]
    %v295 = vld [vmem:[#allocation2 + $0xe8] sm:$0xff]
    %v296 = vld [vmem:[#allocation2 + $0xf0] sm:$0xff]
    %v297 = vld [vmem:[#allocation2 + $0xf8] sm:$0xff]
    %v298 = vld [vmem:[#allocation2 + $0x100] sm:$0xff]
    %v299 = vld [vmem:[#allocation2 + $0x108] sm:$0xff]
    %v300 = vld [vmem:[#allocation2 + $0x110] sm:$0xff]
    %v301 = vld [vmem:[#allocation2 + $0x118] sm:$0xff]
    %v302 = vld [vmem:[#allocation2 + $0x120] sm:$0xff]
    %v303 = vld [vmem:[#allocation2 + $0x128] sm:$0xff]
    %v304 = vld [vmem:[#allocation2 + $0x130] sm:$0xff]
    %v305 = vld [vmem:[#allocation2 + $0x138] sm:$0xff]
    %v306 = vld [vmem:[#allocation2 + $0x140] sm:$0xff]
    %v307 = vld [vmem:[#allocation2 + $0x148] sm:$0xff]
    %v308 = vld [vmem:[#allocation2 + $0x150] sm:$0xff]
    %v309 = vld [vmem:[#allocation2 + $0x158] sm:$0xff]
    %v310 = vld [vmem:[#allocation2 + $0x160] sm:$0xff]
    %v311 = vld [vmem:[#allocation2 + $0x168] sm:$0xff]
    %v312 = vld [vmem:[#allocation2 + $0x170] sm:$0xff]
    %v313 = vld [vmem:[#allocation2 + $0x178] sm:$0xff]
    %v314 = vld [vmem:[#allocation2 + $0x180] sm:$0xff]
    %v315 = vld [vmem:[#allocation2 + $0x188] sm:$0xff]
    %v316 = vld [vmem:[#allocation2 + $0x190] sm:$0xff]
    %v317 = vld [vmem:[#allocation2 + $0x198] sm:$0xff]
    %v318 = vld [vmem:[#allocation2 + $0x1a0] sm:$0xff]
    %v319 = vld [vmem:[#allocation2 + $0x1a8] sm:$0xff]
    %v320 = vld [vmem:[#allocation2 + $0x1b0] sm:$0xff]
    %v321 = vld [vmem:[#allocation2 + $0x1b8] sm:$0xff]
    %v322 = vld [vmem:[#allocation2 + $0x1c0] sm:$0xff]
    %v323 = vld [vmem:[#allocation2 + $0x1c8] sm:$0xff]
    %v324 = vld [vmem:[#allocation2 + $0x1d0] sm:$0xff]
    %v325 = vld [vmem:[#allocation2 + $0x1d8] sm:$0xff]
    %v326 = vld [vmem:[#allocation2 + $0x1e0] sm:$0xff]
    %v327 = vld [vmem:[#allocation2 + $0x1e8] sm:$0xff]
    %v328 = vld [vmem:[#allocation2 + $0x1f0] sm:$0xff]
    %v329 = vld [vmem:[#allocation2 + $0x1f8] sm:$0xff]
    %v330 = vld [vmem:[#allocation2 + $0x200] sm:$0xff]
    %v331 = vld [vmem:[#allocation2 + $0x208] sm:$0xff]
    %v332 = vld [vmem:[#allocation2 + $0x210] sm:$0xff]
    %v333 = vld [vmem:[#allocation2 + $0x218] sm:$0xff]
    %v334 = vld [vmem:[#allocation2 + $0x220] sm:$0xff]
    %v335 = vld [vmem:[#allocation2 + $0x228] sm:$0xff]
    %v336 = vld [vmem:[#allocation2 + $0x230] sm:$0xff]
    %v337 = vld [vmem:[#allocation2 + $0x238] sm:$0xff]
    %v338 = vld [vmem:[#allocation2 + $0x240] sm:$0xff]
    %v339 = vld [vmem:[#allocation2 + $0x248] sm:$0xff]
    %v340 = vld [vmem:[#allocation2 + $0x250] sm:$0xff]
    %v341 = vld [vmem:[#allocation2 + $0x258] sm:$0xff]
    %v342 = vld [vmem:[#allocation2 + $0x260] sm:$0xff]
    %v343 = vld [vmem:[#allocation2 + $0x268] sm:$0xff]
    %v344 = vld [vmem:[#allocation2 + $0x270] sm:$0xff]
    %v345 = vld [vmem:[#allocation2 + $0x278] sm:$0xff]
    %v346 = vld [vmem:[#allocation2 + $0x280] sm:$0xff]
    %v347 = vld [vmem:[#allocation2 + $0x288] sm:$0xff]
    %v348 = vld [vmem:[#allocation2 + $0x290] sm:$0xff]
    %v349 = vld [vmem:[#allocation2 + $0x298] sm:$0xff]
    %v350 = vld [vmem:[#allocation2 + $0x2a0] sm:$0xff]
    %v351 = vld [vmem:[#allocation2 + $0x2a8] sm:$0xff]
    %v352 = vld [vmem:[#allocation2 + $0x2b0] sm:$0xff]
    %v353 = vld [vmem:[#allocation2 + $0x2b8] sm:$0xff]
    %v354 = vld [vmem:[#allocation2 + $0x2c0] sm:$0xff]
    %v355 = vld [vmem:[#allocation2 + $0x2c8] sm:$0xff]
    %v356 = vld [vmem:[#allocation2 + $0x2d0] sm:$0xff]
    %v357 = vld [vmem:[#allocation2 + $0x2d8] sm:$0xff]
    %v358 = vld [vmem:[#allocation2 + $0x2e0] sm:$0xff]
    %v359 = vld [vmem:[#allocation2 + $0x2e8] sm:$0xff]
    %v360 = vld [vmem:[#allocation2 + $0x2f0] sm:$0xff]
    %v361 = vld [vmem:[#allocation2 + $0x2f8] sm:$0xff]
    %v458 = vunpack.c.l.b16 %v266
    %v459 = vunpack.c.h.b16 %v266
    %v460 = vunpack.c.l.b16 %v267
    %v461 = vunpack.c.h.b16 %v267
    %v462 = vunpack.c.l.b16 %v268
    %v463 = vunpack.c.h.b16 %v268
    %v464 = vunpack.c.l.b16 %v269
    %v465 = vunpack.c.h.b16 %v269
    %v466 = vunpack.c.l.b16 %v270
    %v467 = vunpack.c.h.b16 %v270
    %v468 = vunpack.c.l.b16 %v271
    %v469 = vunpack.c.h.b16 %v271
    %v470 = vunpack.c.l.b16 %v272
    %v471 = vunpack.c.h.b16 %v272
    %v472 = vunpack.c.l.b16 %v273
    %v473 = vunpack.c.h.b16 %v273
    %v474 = vunpack.c.l.b16 %v274
    %v475 = vunpack.c.h.b16 %v274
    %v476 = vunpack.c.l.b16 %v275
    %v477 = vunpack.c.h.b16 %v275
    %v478 = vunpack.c.l.b16 %v276
    %v479 = vunpack.c.h.b16 %v276
    %v480 = vunpack.c.l.b16 %v277
    %v481 = vunpack.c.h.b16 %v277
    %v482 = vunpack.c.l.b16 %v278
    %v483 = vunpack.c.h.b16 %v278
    %v484 = vunpack.c.l.b16 %v279
    %v485 = vunpack.c.h.b16 %v279
    %v486 = vunpack.c.l.b16 %v280
    %v487 = vunpack.c.h.b16 %v280
    %v488 = vunpack.c.l.b16 %v281
    %v489 = vunpack.c.h.b16 %v281
    %v490 = vunpack.c.l.b16 %v282
    %v491 = vunpack.c.h.b16 %v282
    %v492 = vunpack.c.l.b16 %v283
    %v493 = vunpack.c.h.b16 %v283
    %v494 = vunpack.c.l.b16 %v284
    %v495 = vunpack.c.h.b16 %v284
    %v496 = vunpack.c.l.b16 %v285
    %v497 = vunpack.c.h.b16 %v285
    %v498 = vunpack.c.l.b16 %v286
    %v499 = vunpack.c.h.b16 %v286
    %v500 = vunpack.c.l.b16 %v287
    %v501 = vunpack.c.h.b16 %v287
    %v502 = vunpack.c.l.b16 %v288
    %v503 = vunpack.c.h.b16 %v288
    %v504 = vunpack.c.l.b16 %v289
    %v505 = vunpack.c.h.b16 %v289
    %v506 = vunpack.c.l.b16 %v290
    %v507 = vunpack.c.h.b16 %v290
    %v508 = vunpack.c.l.b16 %v291
    %v509 = vunpack.c.h.b16 %v291
    %v510 = vunpack.c.l.b16 %v292
    %v511 = vunpack.c.h.b16 %v292
    %v512 = vunpack.c.l.b16 %v293
    %v513 = vunpack.c.h.b16 %v293
    %v514 = vunpack.c.l.b16 %v294
    %v515 = vunpack.c.h.b16 %v294
    %v516 = vunpack.c.l.b16 %v295
    %v517 = vunpack.c.h.b16 %v295
    %v518 = vunpack.c.l.b16 %v296
    %v519 = vunpack.c.h.b16 %v296
    %v520 = vunpack.c.l.b16 %v297
    %v521 = vunpack.c.h.b16 %v297
    %v522 = vunpack.c.l.b16 %v298
    %v523 = vunpack.c.h.b16 %v298
    %v524 = vunpack.c.l.b16 %v299
    %v525 = vunpack.c.h.b16 %v299
    %v526 = vunpack.c.l.b16 %v300
    %v527 = vunpack.c.h.b16 %v300
    %v528 = vunpack.c.l.b16 %v301
    %v529 = vunpack.c.h.b16 %v301
    %v530 = vunpack.c.l.b16 %v302
    %v531 = vunpack.c.h.b16 %v302
    %v532 = vunpack.c.l.b16 %v303
    %v533 = vunpack.c.h.b16 %v303
    %v534 = vunpack.c.l.b16 %v304
    %v535 = vunpack.c.h.b16 %v304
    %v536 = vunpack.c.l.b16 %v305
    %v537 = vunpack.c.h.b16 %v305
    %v538 = vunpack.c.l.b16 %v306
    %v539 = vunpack.c.h.b16 %v306
    %v540 = vunpack.c.l.b16 %v307
    %v541 = vunpack.c.h.b16 %v307
    %v542 = vunpack.c.l.b16 %v308
    %v543 = vunpack.c.h.b16 %v308
    %v544 = vunpack.c.l.b16 %v309
    %v545 = vunpack.c.h.b16 %v309
    %v546 = vunpack.c.l.b16 %v310
    %v547 = vunpack.c.h.b16 %v310
    %v548 = vunpack.c.l.b16 %v311
    %v549 = vunpack.c.h.b16 %v311
    %v550 = vunpack.c.l.b16 %v312
    %v551 = vunpack.c.h.b16 %v312
    %v552 = vunpack.c.l.b16 %v313
    %v553 = vunpack.c.h.b16 %v313
    %v554 = vunpack.c.l.b16 %v314
    %v555 = vunpack.c.h.b16 %v314
    %v556 = vunpack.c.l.b16 %v315
    %v557 = vunpack.c.h.b16 %v315
    %v558 = vunpack.c.l.b16 %v316
    %v559 = vunpack.c.h.b16 %v316
    %v560 = vunpack.c.l.b16 %v317
    %v561 = vunpack.c.h.b16 %v317
    %v562 = vunpack.c.l.b16 %v318
    %v563 = vunpack.c.h.b16 %v318
    %v564 = vunpack.c.l.b16 %v319
    %v565 = vunpack.c.h.b16 %v319
    %v566 = vunpack.c.l.b16 %v320
    %v567 = vunpack.c.h.b16 %v320
    %v568 = vunpack.c.l.b16 %v321
    %v569 = vunpack.c.h.b16 %v321
    %v570 = vunpack.c.l.b16 %v322
    %v571 = vunpack.c.h.b16 %v322
    %v572 = vunpack.c.l.b16 %v323
    %v573 = vunpack.c.h.b16 %v323
    %v574 = vunpack.c.l.b16 %v324
    %v575 = vunpack.c.h.b16 %v324
    %v576 = vunpack.c.l.b16 %v325
    %v577 = vunpack.c.h.b16 %v325
    %v578 = vunpack.c.l.b16 %v326
    %v579 = vunpack.c.h.b16 %v326
    %v580 = vunpack.c.l.b16 %v327
    %v581 = vunpack.c.h.b16 %v327
    %v582 = vunpack.c.l.b16 %v328
    %v583 = vunpack.c.h.b16 %v328
    %v584 = vunpack.c.l.b16 %v329
    %v585 = vunpack.c.h.b16 %v329
    %v586 = vunpack.c.l.b16 %v330
    %v587 = vunpack.c.h.b16 %v330
    %v588 = vunpack.c.l.b16 %v331
    %v589 = vunpack.c.h.b16 %v331
    %v590 = vunpack.c.l.b16 %v332
    %v591 = vunpack.c.h.b16 %v332
    %v592 = vunpack.c.l.b16 %v333
    %v593 = vunpack.c.h.b16 %v333
    %v594 = vunpack.c.l.b16 %v334
    %v595 = vunpack.c.h.b16 %v334
    %v596 = vunpack.c.l.b16 %v335
    %v597 = vunpack.c.h.b16 %v335
    %v598 = vunpack.c.l.b16 %v336
    %v599 = vunpack.c.h.b16 %v336
    %v600 = vunpack.c.l.b16 %v337
    %v601 = vunpack.c.h.b16 %v337
    %v602 = vunpack.c.l.b16 %v338
    %v603 = vunpack.c.h.b16 %v338
    %v604 = vunpack.c.l.b16 %v339
    %v605 = vunpack.c.h.b16 %v339
    %v606 = vunpack.c.l.b16 %v340
    %v607 = vunpack.c.h.b16 %v340
    %v608 = vunpack.c.l.b16 %v341
    %v609 = vunpack.c.h.b16 %v341
    %v610 = vunpack.c.l.b16 %v342
    %v611 = vunpack.c.h.b16 %v342
    %v612 = vunpack.c.l.b16 %v343
    %v613 = vunpack.c.h.b16 %v343
    %v614 = vunpack.c.l.b16 %v344
    %v615 = vunpack.c.h.b16 %v344
    %v616 = vunpack.c.l.b16 %v345
    %v617 = vunpack.c.h.b16 %v345
    %v618 = vunpack.c.l.b16 %v346
    %v619 = vunpack.c.h.b16 %v346
    %v620 = vunpack.c.l.b16 %v347
    %v621 = vunpack.c.h.b16 %v347
    %v622 = vunpack.c.l.b16 %v348
    %v623 = vunpack.c.h.b16 %v348
    %v624 = vunpack.c.l.b16 %v349
    %v625 = vunpack.c.h.b16 %v349
    %v626 = vunpack.c.l.b16 %v350
    %v627 = vunpack.c.h.b16 %v350
    %v628 = vunpack.c.l.b16 %v351
    %v629 = vunpack.c.h.b16 %v351
    %v630 = vunpack.c.l.b16 %v352
    %v631 = vunpack.c.h.b16 %v352
    %v632 = vunpack.c.l.b16 %v353
    %v633 = vunpack.c.h.b16 %v353
    %v634 = vunpack.c.l.b16 %v354
    %v635 = vunpack.c.h.b16 %v354
    %v636 = vunpack.c.l.b16 %v355
    %v637 = vunpack.c.h.b16 %v355
    %v638 = vunpack.c.l.b16 %v356
    %v639 = vunpack.c.h.b16 %v356
    %v640 = vunpack.c.l.b16 %v357
    %v641 = vunpack.c.h.b16 %v357
    %v642 = vunpack.c.l.b16 %v358
    %v643 = vunpack.c.h.b16 %v358
    %v644 = vunpack.c.l.b16 %v359
    %v645 = vunpack.c.h.b16 %v359
    %v646 = vunpack.c.l.b16 %v360
    %v647 = vunpack.c.h.b16 %v360
    %v648 = vunpack.c.l.b16 %v361
    %v649 = vunpack.c.h.b16 %v361
    %v650 = vpack.c.b16 %v460, %v458
    %v651 = vpack.c.b16 %v461, %v459
    %v652 = vpack.c.b16 %v464, %v462
    %v653 = vpack.c.b16 %v465, %v463
    %v654 = vpack.c.b16 %v468, %v466
    %v655 = vpack.c.b16 %v469, %v467
    %v656 = vpack.c.b16 %v472, %v470
    %v657 = vpack.c.b16 %v473, %v471
    %v658 = vpack.c.b16 %v476, %v474
    %v659 = vpack.c.b16 %v477, %v475
    %v660 = vpack.c.b16 %v480, %v478
    %v661 = vpack.c.b16 %v481, %v479
    %v662 = vpack.c.b16 %v484, %v482
    %v663 = vpack.c.b16 %v485, %v483
    %v664 = vpack.c.b16 %v488, %v486
    %v665 = vpack.c.b16 %v489, %v487
    %v666 = vpack.c.b16 %v492, %v490
    %v667 = vpack.c.b16 %v493, %v491
    %v668 = vpack.c.b16 %v496, %v494
    %v669 = vpack.c.b16 %v497, %v495
    %v670 = vpack.c.b16 %v500, %v498
    %v671 = vpack.c.b16 %v501, %v499
    %v672 = vpack.c.b16 %v504, %v502
    %v673 = vpack.c.b16 %v505, %v503
    %v674 = vpack.c.b16 %v508, %v506
    %v675 = vpack.c.b16 %v509, %v507
    %v676 = vpack.c.b16 %v512, %v510
    %v677 = vpack.c.b16 %v513, %v511
    %v678 = vpack.c.b16 %v516, %v514
    %v679 = vpack.c.b16 %v517, %v515
    %v680 = vpack.c.b16 %v520, %v518
    %v681 = vpack.c.b16 %v521, %v519
    %v682 = vpack.c.b16 %v524, %v522
    %v683 = vpack.c.b16 %v525, %v523
    %v684 = vpack.c.b16 %v528, %v526
    %v685 = vpack.c.b16 %v529, %v527
    %v686 = vpack.c.b16 %v532, %v530
    %v687 = vpack.c.b16 %v533, %v531
    %v688 = vpack.c.b16 %v536, %v534
    %v689 = vpack.c.b16 %v537, %v535
    %v690 = vpack.c.b16 %v540, %v538
    %v691 = vpack.c.b16 %v541, %v539
    %v692 = vpack.c.b16 %v544, %v542
    %v693 = vpack.c.b16 %v545, %v543
    %v694 = vpack.c.b16 %v548, %v546
    %v695 = vpack.c.b16 %v549, %v547
    %v696 = vpack.c.b16 %v552, %v550
    %v697 = vpack.c.b16 %v553, %v551
    %v698 = vpack.c.b16 %v556, %v554
    %v699 = vpack.c.b16 %v557, %v555
    %v700 = vpack.c.b16 %v560, %v558
    %v701 = vpack.c.b16 %v561, %v559
    %v702 = vpack.c.b16 %v564, %v562
    %v703 = vpack.c.b16 %v565, %v563
    %v704 = vpack.c.b16 %v568, %v566
    %v705 = vpack.c.b16 %v569, %v567
    %v706 = vpack.c.b16 %v572, %v570
    %v707 = vpack.c.b16 %v573, %v571
    %v708 = vpack.c.b16 %v576, %v574
    %v709 = vpack.c.b16 %v577, %v575
    %v710 = vpack.c.b16 %v580, %v578
    %v711 = vpack.c.b16 %v581, %v579
    %v712 = vpack.c.b16 %v584, %v582
    %v713 = vpack.c.b16 %v585, %v583
    %v714 = vpack.c.b16 %v588, %v586
    %v715 = vpack.c.b16 %v589, %v587
    %v716 = vpack.c.b16 %v592, %v590
    %v717 = vpack.c.b16 %v593, %v591
    %v718 = vpack.c.b16 %v596, %v594
    %v719 = vpack.c.b16 %v597, %v595
    %v720 = vpack.c.b16 %v600, %v598
    %v721 = vpack.c.b16 %v601, %v599
    %v722 = vpack.c.b16 %v604, %v602
    %v723 = vpack.c.b16 %v605, %v603
    %v724 = vpack.c.b16 %v608, %v606
    %v725 = vpack.c.b16 %v609, %v607
    %v726 = vpack.c.b16 %v612, %v610
    %v727 = vpack.c.b16 %v613, %v611
    %v728 = vpack.c.b16 %v616, %v614
    %v729 = vpack.c.b16 %v617, %v615
    %v730 = vpack.c.b16 %v620, %v618
    %v731 = vpack.c.b16 %v621, %v619
    %v732 = vpack.c.b16 %v624, %v622
    %v733 = vpack.c.b16 %v625, %v623
    %v734 = vpack.c.b16 %v628, %v626
    %v735 = vpack.c.b16 %v629, %v627
    %v736 = vpack.c.b16 %v632, %v630
    %v737 = vpack.c.b16 %v633, %v631
    %v738 = vpack.c.b16 %v636, %v634
    %v739 = vpack.c.b16 %v637, %v635
    %v740 = vpack.c.b16 %v640, %v638
    %v741 = vpack.c.b16 %v641, %v639
    %v742 = vpack.c.b16 %v644, %v642
    %v743 = vpack.c.b16 %v645, %v643
    %v744 = vpack.c.b16 %v648, %v646
    %v745 = vpack.c.b16 %v649, %v647
    %842 = vmatprep.subr.bf16.mxu0 %v651
    %843 = vmatpush1.bf16.msra.mxu0 %v650
    %844 = vmatprep.subr.bf16.mxu0 %v653
    %845 = vmatpush1.bf16.msra.mxu0 %v652
    %846 = vmatprep.subr.bf16.mxu0 %v655
    %847 = vmatpush1.bf16.msra.mxu0 %v654
    %848 = vmatprep.subr.bf16.mxu0 %v657
    %849 = vmatpush1.bf16.msra.mxu0 %v656
    %850 = vmatprep.subr.bf16.mxu0 %v659
    %851 = vmatpush1.bf16.msra.mxu0 %v658
    %852 = vmatprep.subr.bf16.mxu0 %v661
    %853 = vmatpush1.bf16.msra.mxu0 %v660
    %854 = vmatprep.subr.bf16.mxu0 %v663
    %855 = vmatpush1.bf16.msra.mxu0 %v662
    %856 = vmatprep.subr.bf16.mxu0 %v665
    %857 = vmatpush1.bf16.msra.mxu0 %v664
    %858 = vmatprep.subr.bf16.mxu0 %v667
    %859 = vmatpush1.bf16.msra.mxu0 %v666
    %860 = vmatprep.subr.bf16.mxu0 %v669
    %861 = vmatpush1.bf16.msra.mxu0 %v668
    %862 = vmatprep.subr.bf16.mxu0 %v671
    %863 = vmatpush1.bf16.msra.mxu0 %v670
    %864 = vmatprep.subr.bf16.mxu0 %v673
    %865 = vmatpush1.bf16.msra.mxu0 %v672
    %866 = vmatprep.subr.bf16.mxu0 %v675
    %867 = vmatpush1.bf16.msra.mxu0 %v674
    %868 = vmatprep.subr.bf16.mxu0 %v677
    %869 = vmatpush1.bf16.msra.mxu0 %v676
    %870 = vmatprep.subr.bf16.mxu0 %v679
    %871 = vmatpush1.bf16.msra.mxu0 %v678
    %872 = vmatprep.subr.bf16.mxu0 %v681
    %873 = vmatpush1.bf16.msra.mxu0 %v680
    %874 = vmatprep.mubr.bf16.mxu0 %v105
    %875 = vmatmul.mubr.bf16.gmra.mrb[0].mxu0 %v104
    %v876 = vpop.f32.mrb[0].mxu0
    %v877 = vadd.f32 %v258, %v876
    %v878 = vpop.f32.mrb[0].mxu0
    %v879 = vadd.f32 %v260, %v878
    %v880 = vpop.f32.mrb[0].mxu0
    %v881 = vadd.f32 %v262, %v880
    %v882 = vpop.f32.mrb[0].mxu0
    %v883 = vadd.f32 %v264, %v882
    %884 = vdwg.mxu0
    %885 = vmatprep.subr.bf16.mxu0 %v683
    %886 = vmatpush1.bf16.msra.mxu0 %v682
    %887 = vmatprep.subr.bf16.mxu0 %v685
    %888 = vmatpush1.bf16.msra.mxu0 %v684
    %889 = vmatprep.subr.bf16.mxu0 %v687
    %890 = vmatpush1.bf16.msra.mxu0 %v686
    %891 = vmatprep.subr.bf16.mxu0 %v689
    %892 = vmatpush1.bf16.msra.mxu0 %v688
    %893 = vmatprep.subr.bf16.mxu0 %v691
    %894 = vmatpush1.bf16.msra.mxu0 %v690
    %895 = vmatprep.subr.bf16.mxu0 %v693
    %896 = vmatpush1.bf16.msra.mxu0 %v692
    %897 = vmatprep.subr.bf16.mxu0 %v695
    %898 = vmatpush1.bf16.msra.mxu0 %v694
    %899 = vmatprep.subr.bf16.mxu0 %v697
    %900 = vmatpush1.bf16.msra.mxu0 %v696
    %901 = vmatprep.subr.bf16.mxu0 %v699
    %902 = vmatpush1.bf16.msra.mxu0 %v698
    %903 = vmatprep.subr.bf16.mxu0 %v701
    %904 = vmatpush1.bf16.msra.mxu0 %v700
    %905 = vmatprep.subr.bf16.mxu0 %v703
    %906 = vmatpush1.bf16.msra.mxu0 %v702
    %907 = vmatprep.subr.bf16.mxu0 %v705
    %908 = vmatpush1.bf16.msra.mxu0 %v704
    %909 = vmatprep.subr.bf16.mxu0 %v707
    %910 = vmatpush1.bf16.msra.mxu0 %v706
    %911 = vmatprep.subr.bf16.mxu0 %v709
    %912 = vmatpush1.bf16.msra.mxu0 %v708
    %913 = vmatprep.subr.bf16.mxu0 %v711
    %914 = vmatpush1.bf16.msra.mxu0 %v710
    %915 = vmatprep.subr.bf16.mxu0 %v713
    %916 = vmatpush1.bf16.msra.mxu0 %v712
    %917 = vmatprep.mubr.bf16.mxu0 %v107
    %918 = vmatmul.mubr.bf16.gmra.mrb[0].mxu0 %v106
    %v919 = vpop.f32.mrb[0].mxu0
    %v920 = vadd.f32 %v877, %v919
    %v921 = vpop.f32.mrb[0].mxu0
    %v922 = vadd.f32 %v879, %v921
    %v923 = vpop.f32.mrb[0].mxu0
    %v924 = vadd.f32 %v881, %v923
    %v925 = vpop.f32.mrb[0].mxu0
    %v926 = vadd.f32 %v883, %v925
    %927 = vdwg.mxu0
    %928 = vmatprep.subr.bf16.mxu0 %v715
    %929 = vmatpush1.bf16.msra.mxu0 %v714
    %930 = vmatprep.subr.bf16.mxu0 %v717
    %931 = vmatpush1.bf16.msra.mxu0 %v716
    %932 = vmatprep.subr.bf16.mxu0 %v719
    %933 = vmatpush1.bf16.msra.mxu0 %v718
    %934 = vmatprep.subr.bf16.mxu0 %v721
    %935 = vmatpush1.bf16.msra.mxu0 %v720
    %936 = vmatprep.subr.bf16.mxu0 %v723
    %937 = vmatpush1.bf16.msra.mxu0 %v722
    %938 = vmatprep.subr.bf16.mxu0 %v725
    %939 = vmatpush1.bf16.msra.mxu0 %v724
    %940 = vmatprep.subr.bf16.mxu0 %v727
    %941 = vmatpush1.bf16.msra.mxu0 %v726
    %942 = vmatprep.subr.bf16.mxu0 %v729
    %943 = vmatpush1.bf16.msra.mxu0 %v728
    %944 = vmatprep.subr.bf16.mxu0 %v731
    %945 = vmatpush1.bf16.msra.mxu0 %v730
    %946 = vmatprep.subr.bf16.mxu0 %v733
    %947 = vmatpush1.bf16.msra.mxu0 %v732
    %948 = vmatprep.subr.bf16.mxu0 %v735
    %949 = vmatpush1.bf16.msra.mxu0 %v734
    %950 = vmatprep.subr.bf16.mxu0 %v737
    %951 = vmatpush1.bf16.msra.mxu0 %v736
    %952 = vmatprep.subr.bf16.mxu0 %v739
    %953 = vmatpush1.bf16.msra.mxu0 %v738
    %954 = vmatprep.subr.bf16.mxu0 %v741
    %955 = vmatpush1.bf16.msra.mxu0 %v740
    %956 = vmatprep.subr.bf16.mxu0 %v743
    %957 = vmatpush1.bf16.msra.mxu0 %v742
    %958 = vmatprep.subr.bf16.mxu0 %v745
    %959 = vmatpush1.bf16.msra.mxu0 %v744
    %960 = vmatprep.mubr.bf16.mxu0 %v109
    %961 = vmatmul.mubr.bf16.gmra.mrb[0].mxu0 %v108
    %v962 = vpop.f32.mrb[0].mxu0
    %v963 = vadd.f32 %v920, %v962
    %v964 = vpop.f32.mrb[0].mxu0
    %v965 = vadd.f32 %v922, %v964
    %v966 = vpop.f32.mrb[0].mxu0
    %v967 = vadd.f32 %v924, %v966
    %v968 = vpop.f32.mrb[0].mxu0
    %v969 = vadd.f32 %v926, %v968
    %970 = vdwg.mxu0
    %v971 = vpack.c.bf16 %v967, %v963
    %v972 = vpack.c.bf16 %v969, %v965
    %v973 = vld [vmem:[#allocation5] sm:$0xff]
    %v974 = vld [vmem:[#allocation5 + $0x8] sm:$0xff]
    %v975 = vld [vmem:[#allocation5 + $0x10] sm:$0xff]
    %v976 = vld [vmem:[#allocation5 + $0x18] sm:$0xff]
    %v977 = vld [vmem:[#allocation5 + $0x20] sm:$0xff]
    %v978 = vld [vmem:[#allocation5 + $0x28] sm:$0xff]
    %v979 = vld [vmem:[#allocation5 + $0x30] sm:$0xff]
    %v980 = vld [vmem:[#allocation5 + $0x38] sm:$0xff]
    %v981 = vld [vmem:[#allocation5 + $0x40] sm:$0xff]
    %v982 = vld [vmem:[#allocation5 + $0x48] sm:$0xff]
    %v983 = vld [vmem:[#allocation5 + $0x50] sm:$0xff]
    %v984 = vld [vmem:[#allocation5 + $0x58] sm:$0xff]
    %v985 = vld [vmem:[#allocation5 + $0x60] sm:$0xff]
    %v986 = vld [vmem:[#allocation5 + $0x68] sm:$0xff]
    %v987 = vld [vmem:[#allocation5 + $0x70] sm:$0xff]
    %v988 = vld [vmem:[#allocation5 + $0x78] sm:$0xff]
    %v989 = vld [vmem:[#allocation5 + $0x80] sm:$0xff]
    %v990 = vld [vmem:[#allocation5 + $0x88] sm:$0xff]
    %v991 = vld [vmem:[#allocation5 + $0x90] sm:$0xff]
    %v992 = vld [vmem:[#allocation5 + $0x98] sm:$0xff]
    %v993 = vld [vmem:[#allocation5 + $0xa0] sm:$0xff]
    %v994 = vld [vmem:[#allocation5 + $0xa8] sm:$0xff]
    %v995 = vld [vmem:[#allocation5 + $0xb0] sm:$0xff]
    %v996 = vld [vmem:[#allocation5 + $0xb8] sm:$0xff]
    %v997 = vld [vmem:[#allocation5 + $0xc0] sm:$0xff]
    %v998 = vld [vmem:[#allocation5 + $0xc8] sm:$0xff]
    %v999 = vld [vmem:[#allocation5 + $0xd0] sm:$0xff]
    %v1000 = vld [vmem:[#allocation5 + $0xd8] sm:$0xff]
    %v1001 = vld [vmem:[#allocation5 + $0xe0] sm:$0xff]
    %v1002 = vld [vmem:[#allocation5 + $0xe8] sm:$0xff]
    %v1003 = vld [vmem:[#allocation5 + $0xf0] sm:$0xff]
    %v1004 = vld [vmem:[#allocation5 + $0xf8] sm:$0xff]
    %v1005 = vld [vmem:[%s5] sm:$0x3]
    %v1007 = vlaneseq
    %v1008 = vshrl.u32 %v1007, 7
    %v1009 = vsub.s32 0, %v1008
    %v1010 = vrot.slane %v1005, %v1009
    %v1011 = vlaneseq
    %v1012 = vshrl.u32 %v1011, 7
    %v1013 = vsub.s32 1, %v1012
    %v1014 = vrot.slane %v1005, %v1013
    %v1049 = vunpack.c.l.b16 %v973
    %v1050 = vunpack.c.h.b16 %v973
    %v1051 = vunpack.c.l.b16 %v974
    %v1052 = vunpack.c.h.b16 %v974
    %v1053 = vunpack.c.l.b16 %v975
    %v1054 = vunpack.c.h.b16 %v975
    %v1055 = vunpack.c.l.b16 %v976
    %v1056 = vunpack.c.h.b16 %v976
    %v1057 = vunpack.c.l.b16 %v977
    %v1058 = vunpack.c.h.b16 %v977
    %v1059 = vunpack.c.l.b16 %v978
    %v1060 = vunpack.c.h.b16 %v978
    %v1061 = vunpack.c.l.b16 %v979
    %v1062 = vunpack.c.h.b16 %v979
    %v1063 = vunpack.c.l.b16 %v980
    %v1064 = vunpack.c.h.b16 %v980
    %v1065 = vunpack.c.l.b16 %v981
    %v1066 = vunpack.c.h.b16 %v981
    %v1067 = vunpack.c.l.b16 %v982
    %v1068 = vunpack.c.h.b16 %v982
    %v1069 = vunpack.c.l.b16 %v983
    %v1070 = vunpack.c.h.b16 %v983
    %v1071 = vunpack.c.l.b16 %v984
    %v1072 = vunpack.c.h.b16 %v984
    %v1073 = vunpack.c.l.b16 %v985
    %v1074 = vunpack.c.h.b16 %v985
    %v1075 = vunpack.c.l.b16 %v986
    %v1076 = vunpack.c.h.b16 %v986
    %v1077 = vunpack.c.l.b16 %v987
    %v1078 = vunpack.c.h.b16 %v987
    %v1079 = vunpack.c.l.b16 %v988
    %v1080 = vunpack.c.h.b16 %v988
    %v1081 = vunpack.c.l.b16 %v989
    %v1082 = vunpack.c.h.b16 %v989
    %v1083 = vunpack.c.l.b16 %v990
    %v1084 = vunpack.c.h.b16 %v990
    %v1085 = vunpack.c.l.b16 %v991
    %v1086 = vunpack.c.h.b16 %v991
    %v1087 = vunpack.c.l.b16 %v992
    %v1088 = vunpack.c.h.b16 %v992
    %v1089 = vunpack.c.l.b16 %v993
    %v1090 = vunpack.c.h.b16 %v993
    %v1091 = vunpack.c.l.b16 %v994
    %v1092 = vunpack.c.h.b16 %v994
    %v1093 = vunpack.c.l.b16 %v995
    %v1094 = vunpack.c.h.b16 %v995
    %v1095 = vunpack.c.l.b16 %v996
    %v1096 = vunpack.c.h.b16 %v996
    %v1097 = vunpack.c.l.b16 %v997
    %v1098 = vunpack.c.h.b16 %v997
    %v1099 = vunpack.c.l.b16 %v998
    %v1100 = vunpack.c.h.b16 %v998
    %v1101 = vunpack.c.l.b16 %v999
    %v1102 = vunpack.c.h.b16 %v999
    %v1103 = vunpack.c.l.b16 %v1000
    %v1104 = vunpack.c.h.b16 %v1000
    %v1105 = vunpack.c.l.b16 %v1001
    %v1106 = vunpack.c.h.b16 %v1001
    %v1107 = vunpack.c.l.b16 %v1002
    %v1108 = vunpack.c.h.b16 %v1002
    %v1109 = vunpack.c.l.b16 %v1003
    %v1110 = vunpack.c.h.b16 %v1003
    %v1111 = vunpack.c.l.b16 %v1004
    %v1112 = vunpack.c.h.b16 %v1004
    %v1113 = vpack.c.b16 %v1051, %v1049
    %v1114 = vpack.c.b16 %v1052, %v1050
    %v1115 = vpack.c.b16 %v1055, %v1053
    %v1116 = vpack.c.b16 %v1056, %v1054
    %v1117 = vpack.c.b16 %v1059, %v1057
    %v1118 = vpack.c.b16 %v1060, %v1058
    %v1119 = vpack.c.b16 %v1063, %v1061
    %v1120 = vpack.c.b16 %v1064, %v1062
    %v1121 = vpack.c.b16 %v1067, %v1065
    %v1122 = vpack.c.b16 %v1068, %v1066
    %v1123 = vpack.c.b16 %v1071, %v1069
    %v1124 = vpack.c.b16 %v1072, %v1070
    %v1125 = vpack.c.b16 %v1075, %v1073
    %v1126 = vpack.c.b16 %v1076, %v1074
    %v1127 = vpack.c.b16 %v1079, %v1077
    %v1128 = vpack.c.b16 %v1080, %v1078
    %v1129 = vpack.c.b16 %v1083, %v1081
    %v1130 = vpack.c.b16 %v1084, %v1082
    %v1131 = vpack.c.b16 %v1087, %v1085
    %v1132 = vpack.c.b16 %v1088, %v1086
    %v1133 = vpack.c.b16 %v1091, %v1089
    %v1134 = vpack.c.b16 %v1092, %v1090
    %v1135 = vpack.c.b16 %v1095, %v1093
    %v1136 = vpack.c.b16 %v1096, %v1094
    %v1137 = vpack.c.b16 %v1099, %v1097
    %v1138 = vpack.c.b16 %v1100, %v1098
    %v1139 = vpack.c.b16 %v1103, %v1101
    %v1140 = vpack.c.b16 %v1104, %v1102
    %v1141 = vpack.c.b16 %v1107, %v1105
    %v1142 = vpack.c.b16 %v1108, %v1106
    %v1143 = vpack.c.b16 %v1111, %v1109
    %v1144 = vpack.c.b16 %v1112, %v1110
    %1177 = vmatprep.subr.bf16.mxu0 %v1114
    %1178 = vmatpush1.bf16.msra.mxu0 %v1113
    %1179 = vmatprep.subr.bf16.mxu0 %v1116
    %1180 = vmatpush1.bf16.msra.mxu0 %v1115
    %1181 = vmatprep.subr.bf16.mxu0 %v1118
    %1182 = vmatpush1.bf16.msra.mxu0 %v1117
    %1183 = vmatprep.subr.bf16.mxu0 %v1120
    %1184 = vmatpush1.bf16.msra.mxu0 %v1119
    %1185 = vmatprep.subr.bf16.mxu0 %v1122
    %1186 = vmatpush1.bf16.msra.mxu0 %v1121
    %1187 = vmatprep.subr.bf16.mxu0 %v1124
    %1188 = vmatpush1.bf16.msra.mxu0 %v1123
    %1189 = vmatprep.subr.bf16.mxu0 %v1126
    %1190 = vmatpush1.bf16.msra.mxu0 %v1125
    %1191 = vmatprep.subr.bf16.mxu0 %v1128
    %1192 = vmatpush1.bf16.msra.mxu0 %v1127
    %1193 = vmatprep.subr.bf16.mxu0 %v1130
    %1194 = vmatpush1.bf16.msra.mxu0 %v1129
    %1195 = vmatprep.subr.bf16.mxu0 %v1132
    %1196 = vmatpush1.bf16.msra.mxu0 %v1131
    %1197 = vmatprep.subr.bf16.mxu0 %v1134
    %1198 = vmatpush1.bf16.msra.mxu0 %v1133
    %1199 = vmatprep.subr.bf16.mxu0 %v1136
    %1200 = vmatpush1.bf16.msra.mxu0 %v1135
    %1201 = vmatprep.subr.bf16.mxu0 %v1138
    %1202 = vmatpush1.bf16.msra.mxu0 %v1137
    %1203 = vmatprep.subr.bf16.mxu0 %v1140
    %1204 = vmatpush1.bf16.msra.mxu0 %v1139
    %1205 = vmatprep.subr.bf16.mxu0 %v1142
    %1206 = vmatpush1.bf16.msra.mxu0 %v1141
    %1207 = vmatprep.subr.bf16.mxu0 %v1144
    %1208 = vmatpush1.bf16.msra.mxu0 %v1143
    %1209 = vmatprep.mubr.bf16.mxu0 %v972
    %1210 = vmatmul.mubr.bf16.gmra.mrb[0].mxu0 %v971
    %v1211 = vpop.f32.mrb[0].mxu0
    %v1212 = vadd.f32 %v1010, %v1211
    %v1213 = vpop.f32.mrb[0].mxu0
    %v1214 = vadd.f32 %v1014, %v1213
    %v1215 = vpop.f32.mrb[0].mxu0
    %v1216 = vadd.f32 %v1010, %v1215
    %v1217 = vpop.f32.mrb[0].mxu0
    %v1218 = vadd.f32 %v1014, %v1217
    %1219 = vdwg.mxu0
    %v1220 = vmax.f32 %v1212, 0.0
    %v1221 = vmax.f32 %v1214, 0.0
    %v1222 = vmax.f32 %v1216, 0.0
    %v1223 = vmax.f32 %v1218, 0.0
    %v1224 = vpack.c.bf16 %v1222, %v1220
    %v1225 = vpack.c.bf16 %v1223, %v1221
    %v1226 = vld [vmem:[#allocation7] sm:$0xff]
    %v1227 = vld [vmem:[#allocation7 + $0x8] sm:$0xff]
    %v1228 = vld [vmem:[#allocation7 + $0x10] sm:$0xff]
    %v1229 = vld [vmem:[#allocation7 + $0x18] sm:$0xff]
    %v1230 = vld [vmem:[#allocation7 + $0x20] sm:$0xff]
    %v1231 = vld [vmem:[#allocation7 + $0x28] sm:$0xff]
    %v1232 = vld [vmem:[#allocation7 + $0x30] sm:$0xff]
    %v1233 = vld [vmem:[#allocation7 + $0x38] sm:$0xff]
    %v1234 = vld [vmem:[#allocation7 + $0x40] sm:$0xff]
    %v1235 = vld [vmem:[#allocation7 + $0x48] sm:$0xff]
    %v1236 = vld [vmem:[#allocation7 + $0x50] sm:$0xff]
    %v1237 = vld [vmem:[#allocation7 + $0x58] sm:$0xff]
    %v1238 = vld [vmem:[#allocation7 + $0x60] sm:$0xff]
    %v1239 = vld [vmem:[#allocation7 + $0x68] sm:$0xff]
    %v1240 = vld [vmem:[#allocation7 + $0x70] sm:$0xff]
    %v1241 = vld [vmem:[#allocation7 + $0x78] sm:$0xff]
    %v1242 = vld [vmem:[#allocation7 + $0x80] sm:$0xff]
    %v1243 = vld [vmem:[#allocation7 + $0x88] sm:$0xff]
    %v1244 = vld [vmem:[#allocation7 + $0x90] sm:$0xff]
    %v1245 = vld [vmem:[#allocation7 + $0x98] sm:$0xff]
    %v1246 = vld [vmem:[#allocation7 + $0xa0] sm:$0xff]
    %v1247 = vld [vmem:[#allocation7 + $0xa8] sm:$0xff]
    %v1248 = vld [vmem:[#allocation7 + $0xb0] sm:$0xff]
    %v1249 = vld [vmem:[#allocation7 + $0xb8] sm:$0xff]
    %v1250 = vld [vmem:[#allocation7 + $0xc0] sm:$0xff]
    %v1251 = vld [vmem:[#allocation7 + $0xc8] sm:$0xff]
    %v1252 = vld [vmem:[#allocation7 + $0xd0] sm:$0xff]
    %v1253 = vld [vmem:[#allocation7 + $0xd8] sm:$0xff]
    %v1254 = vld [vmem:[#allocation7 + $0xe0] sm:$0xff]
    %v1255 = vld [vmem:[#allocation7 + $0xe8] sm:$0xff]
    %v1256 = vld [vmem:[#allocation7 + $0xf0] sm:$0xff]
    %v1257 = vld [vmem:[#allocation7 + $0xf8] sm:$0xff]
    %v1258 = vld [vmem:[%s7] sm:$0x3]
    %v1260 = vlaneseq
    %v1261 = vshrl.u32 %v1260, 7
    %v1262 = vsub.s32 0, %v1261
    %v1263 = vrot.slane %v1258, %v1262
    %v1264 = vlaneseq
    %v1265 = vshrl.u32 %v1264, 7
    %v1266 = vsub.s32 1, %v1265
    %v1267 = vrot.slane %v1258, %v1266
    %v1302 = vunpack.c.l.b16 %v1226
    %v1303 = vunpack.c.h.b16 %v1226
    %v1304 = vunpack.c.l.b16 %v1227
    %v1305 = vunpack.c.h.b16 %v1227
    %v1306 = vunpack.c.l.b16 %v1228
    %v1307 = vunpack.c.h.b16 %v1228
    %v1308 = vunpack.c.l.b16 %v1229
    %v1309 = vunpack.c.h.b16 %v1229
    %v1310 = vunpack.c.l.b16 %v1230
    %v1311 = vunpack.c.h.b16 %v1230
    %v1312 = vunpack.c.l.b16 %v1231
    %v1313 = vunpack.c.h.b16 %v1231
    %v1314 = vunpack.c.l.b16 %v1232
    %v1315 = vunpack.c.h.b16 %v1232
    %v1316 = vunpack.c.l.b16 %v1233
    %v1317 = vunpack.c.h.b16 %v1233
    %v1318 = vunpack.c.l.b16 %v1234
    %v1319 = vunpack.c.h.b16 %v1234
    %v1320 = vunpack.c.l.b16 %v1235
    %v1321 = vunpack.c.h.b16 %v1235
    %v1322 = vunpack.c.l.b16 %v1236
    %v1323 = vunpack.c.h.b16 %v1236
    %v1324 = vunpack.c.l.b16 %v1237
    %v1325 = vunpack.c.h.b16 %v1237
    %v1326 = vunpack.c.l.b16 %v1238
    %v1327 = vunpack.c.h.b16 %v1238
    %v1328 = vunpack.c.l.b16 %v1239
    %v1329 = vunpack.c.h.b16 %v1239
    %v1330 = vunpack.c.l.b16 %v1240
    %v1331 = vunpack.c.h.b16 %v1240
    %v1332 = vunpack.c.l.b16 %v1241
    %v1333 = vunpack.c.h.b16 %v1241
    %v1334 = vunpack.c.l.b16 %v1242
    %v1335 = vunpack.c.h.b16 %v1242
    %v1336 = vunpack.c.l.b16 %v1243
    %v1337 = vunpack.c.h.b16 %v1243
    %v1338 = vunpack.c.l.b16 %v1244
    %v1339 = vunpack.c.h.b16 %v1244
    %v1340 = vunpack.c.l.b16 %v1245
    %v1341 = vunpack.c.h.b16 %v1245
    %v1342 = vunpack.c.l.b16 %v1246
    %v1343 = vunpack.c.h.b16 %v1246
    %v1344 = vunpack.c.l.b16 %v1247
    %v1345 = vunpack.c.h.b16 %v1247
    %v1346 = vunpack.c.l.b16 %v1248
    %v1347 = vunpack.c.h.b16 %v1248
    %v1348 = vunpack.c.l.b16 %v1249
    %v1349 = vunpack.c.h.b16 %v1249
    %v1350 = vunpack.c.l.b16 %v1250
    %v1351 = vunpack.c.h.b16 %v1250
    %v1352 = vunpack.c.l.b16 %v1251
    %v1353 = vunpack.c.h.b16 %v1251
    %v1354 = vunpack.c.l.b16 %v1252
    %v1355 = vunpack.c.h.b16 %v1252
    %v1356 = vunpack.c.l.b16 %v1253
    %v1357 = vunpack.c.h.b16 %v1253
    %v1358 = vunpack.c.l.b16 %v1254
    %v1359 = vunpack.c.h.b16 %v1254
    %v1360 = vunpack.c.l.b16 %v1255
    %v1361 = vunpack.c.h.b16 %v1255
    %v1362 = vunpack.c.l.b16 %v1256
    %v1363 = vunpack.c.h.b16 %v1256
    %v1364 = vunpack.c.l.b16 %v1257
    %v1365 = vunpack.c.h.b16 %v1257
    %v1366 = vpack.c.b16 %v1304, %v1302
    %v1367 = vpack.c.b16 %v1305, %v1303
    %v1368 = vpack.c.b16 %v1308, %v1306
    %v1369 = vpack.c.b16 %v1309, %v1307
    %v1370 = vpack.c.b16 %v1312, %v1310
    %v1371 = vpack.c.b16 %v1313, %v1311
    %v1372 = vpack.c.b16 %v1316, %v1314
    %v1373 = vpack.c.b16 %v1317, %v1315
    %v1374 = vpack.c.b16 %v1320, %v1318
    %v1375 = vpack.c.b16 %v1321, %v1319
    %v1376 = vpack.c.b16 %v1324, %v1322
    %v1377 = vpack.c.b16 %v1325, %v1323
    %v1378 = vpack.c.b16 %v1328, %v1326
    %v1379 = vpack.c.b16 %v1329, %v1327
    %v1380 = vpack.c.b16 %v1332, %v1330
    %v1381 = vpack.c.b16 %v1333, %v1331
    %v1382 = vpack.c.b16 %v1336, %v1334
    %v1383 = vpack.c.b16 %v1337, %v1335
    %v1384 = vpack.c.b16 %v1340, %v1338
    %v1385 = vpack.c.b16 %v1341, %v1339
    %v1386 = vpack.c.b16 %v1344, %v1342
    %v1387 = vpack.c.b16 %v1345, %v1343
    %v1388 = vpack.c.b16 %v1348, %v1346
    %v1389 = vpack.c.b16 %v1349, %v1347
    %v1390 = vpack.c.b16 %v1352, %v1350
    %v1391 = vpack.c.b16 %v1353, %v1351
    %v1392 = vpack.c.b16 %v1356, %v1354
    %v1393 = vpack.c.b16 %v1357, %v1355
    %v1394 = vpack.c.b16 %v1360, %v1358
    %v1395 = vpack.c.b16 %v1361, %v1359
    %v1396 = vpack.c.b16 %v1364, %v1362
    %v1397 = vpack.c.b16 %v1365, %v1363
    %1430 = vmatprep.subr.bf16.mxu0 %v1367
    %1431 = vmatpush1.bf16.msra.mxu0 %v1366
    %1432 = vmatprep.subr.bf16.mxu0 %v1369
    %1433 = vmatpush1.bf16.msra.mxu0 %v1368
    %1434 = vmatprep.subr.bf16.mxu0 %v1371
    %1435 = vmatpush1.bf16.msra.mxu0 %v1370
    %1436 = vmatprep.subr.bf16.mxu0 %v1373
    %1437 = vmatpush1.bf16.msra.mxu0 %v1372
    %1438 = vmatprep.subr.bf16.mxu0 %v1375
    %1439 = vmatpush1.bf16.msra.mxu0 %v1374
    %1440 = vmatprep.subr.bf16.mxu0 %v1377
    %1441 = vmatpush1.bf16.msra.mxu0 %v1376
    %1442 = vmatprep.subr.bf16.mxu0 %v1379
    %1443 = vmatpush1.bf16.msra.mxu0 %v1378
    %1444 = vmatprep.subr.bf16.mxu0 %v1381
    %1445 = vmatpush1.bf16.msra.mxu0 %v1380
    %1446 = vmatprep.subr.bf16.mxu0 %v1383
    %1447 = vmatpush1.bf16.msra.mxu0 %v1382
    %1448 = vmatprep.subr.bf16.mxu0 %v1385
    %1449 = vmatpush1.bf16.msra.mxu0 %v1384
    %1450 = vmatprep.subr.bf16.mxu0 %v1387
    %1451 = vmatpush1.bf16.msra.mxu0 %v1386
    %1452 = vmatprep.subr.bf16.mxu0 %v1389
    %1453 = vmatpush1.bf16.msra.mxu0 %v1388
    %1454 = vmatprep.subr.bf16.mxu0 %v1391
    %1455 = vmatpush1.bf16.msra.mxu0 %v1390
    %1456 = vmatprep.subr.bf16.mxu0 %v1393
    %1457 = vmatpush1.bf16.msra.mxu0 %v1392
    %1458 = vmatprep.subr.bf16.mxu0 %v1395
    %1459 = vmatpush1.bf16.msra.mxu0 %v1394
    %1460 = vmatprep.subr.bf16.mxu0 %v1397
    %1461 = vmatpush1.bf16.msra.mxu0 %v1396
    %1462 = vmatprep.mubr.bf16.mxu0 %v1225
    %1463 = vmatmul.mubr.bf16.gmra.mrb[0].mxu0 %v1224
    %v1464 = vpop.f32.mrb[0].mxu0
    %v1465 = vadd.f32 %v1263, %v1464
    %v1466 = vpop.f32.mrb[0].mxu0
    %v1467 = vadd.f32 %v1267, %v1466
    %v1468 = vpop.f32.mrb[0].mxu0
    %v1469 = vadd.f32 %v1263, %v1468
    %v1470 = vpop.f32.mrb[0].mxu0
    %v1471 = vadd.f32 %v1267, %v1470
    %1472 = vdwg.mxu0
    %v1473 = vmax.f32 %v1465, 0.0
    %v1474 = vmax.f32 %v1467, 0.0
    %v1475 = vmax.f32 %v1469, 0.0
    %v1476 = vmax.f32 %v1471, 0.0
    %v1477 = vpack.c.bf16 %v1475, %v1473
    %v1478 = vpack.c.bf16 %v1476, %v1474
    %v1479 = vld [vmem:[#allocation8] sm:$0xff]
    %v1480 = vld [vmem:[#allocation8 + $0x8] sm:$0xff]
    %v1481 = vld [vmem:[#allocation8 + $0x10] sm:$0xff]
    %v1482 = vld [vmem:[#allocation8 + $0x18] sm:$0xff]
    %v1483 = vld [vmem:[#allocation8 + $0x20] sm:$0xff]
    %v1484 = vld [vmem:[#allocation8 + $0x28] sm:$0xff]
    %v1485 = vld [vmem:[#allocation8 + $0x30] sm:$0xff]
    %v1486 = vld [vmem:[#allocation8 + $0x38] sm:$0xff]
    %v1487 = vld [vmem:[#allocation8 + $0x40] sm:$0xff]
    %v1488 = vld [vmem:[#allocation8 + $0x48] sm:$0xff]
    %v1489 = vld [vmem:[#allocation8 + $0x50] sm:$0xff]
    %v1490 = vld [vmem:[#allocation8 + $0x58] sm:$0xff]
    %v1491 = vld [vmem:[#allocation8 + $0x60] sm:$0xff]
    %v1492 = vld [vmem:[#allocation8 + $0x68] sm:$0xff]
    %v1493 = vld [vmem:[#allocation8 + $0x70] sm:$0xff]
    %v1494 = vld [vmem:[#allocation8 + $0x78] sm:$0xff]
    %v1495 = vld [vmem:[#allocation8 + $0x80] sm:$0xff]
    %v1496 = vld [vmem:[#allocation8 + $0x88] sm:$0xff]
    %v1497 = vld [vmem:[#allocation8 + $0x90] sm:$0xff]
    %v1498 = vld [vmem:[#allocation8 + $0x98] sm:$0xff]
    %v1499 = vld [vmem:[#allocation8 + $0xa0] sm:$0xff]
    %v1500 = vld [vmem:[#allocation8 + $0xa8] sm:$0xff]
    %v1501 = vld [vmem:[#allocation8 + $0xb0] sm:$0xff]
    %v1502 = vld [vmem:[#allocation8 + $0xb8] sm:$0xff]
    %v1503 = vld [vmem:[#allocation8 + $0xc0] sm:$0xff]
    %v1504 = vld [vmem:[#allocation8 + $0xc8] sm:$0xff]
    %v1505 = vld [vmem:[#allocation8 + $0xd0] sm:$0xff]
    %v1506 = vld [vmem:[#allocation8 + $0xd8] sm:$0xff]
    %v1507 = vld [vmem:[#allocation8 + $0xe0] sm:$0xff]
    %v1508 = vld [vmem:[#allocation8 + $0xe8] sm:$0xff]
    %v1509 = vld [vmem:[#allocation8 + $0xf0] sm:$0xff]
    %v1510 = vld [vmem:[#allocation8 + $0xf8] sm:$0xff]
    %v1511 = vld [vmem:[#allocation8 + $0x100] sm:$0xff]
    %v1512 = vld [vmem:[#allocation8 + $0x108] sm:$0xff]
    %v1513 = vld [vmem:[#allocation8 + $0x110] sm:$0xff]
    %v1514 = vld [vmem:[#allocation8 + $0x118] sm:$0xff]
    %v1515 = vld [vmem:[#allocation8 + $0x120] sm:$0xff]
    %v1516 = vld [vmem:[#allocation8 + $0x128] sm:$0xff]
    %v1517 = vld [vmem:[#allocation8 + $0x130] sm:$0xff]
    %v1518 = vld [vmem:[#allocation8 + $0x138] sm:$0xff]
    %v1519 = vld [vmem:[#allocation8 + $0x140] sm:$0xff]
    %v1520 = vld [vmem:[#allocation8 + $0x148] sm:$0xff]
    %v1521 = vld [vmem:[#allocation8 + $0x150] sm:$0xff]
    %v1522 = vld [vmem:[#allocation8 + $0x158] sm:$0xff]
    %v1523 = vld [vmem:[#allocation8 + $0x160] sm:$0xff]
    %v1524 = vld [vmem:[#allocation8 + $0x168] sm:$0xff]
    %v1525 = vld [vmem:[#allocation8 + $0x170] sm:$0xff]
    %v1526 = vld [vmem:[#allocation8 + $0x178] sm:$0xff]
    %v1527 = vld [vmem:[#allocation8 + $0x180] sm:$0xff]
    %v1528 = vld [vmem:[#allocation8 + $0x188] sm:$0xff]
    %v1529 = vld [vmem:[#allocation8 + $0x190] sm:$0xff]
    %v1530 = vld [vmem:[#allocation8 + $0x198] sm:$0xff]
    %v1531 = vld [vmem:[#allocation8 + $0x1a0] sm:$0xff]
    %v1532 = vld [vmem:[#allocation8 + $0x1a8] sm:$0xff]
    %v1533 = vld [vmem:[#allocation8 + $0x1b0] sm:$0xff]
    %v1534 = vld [vmem:[#allocation8 + $0x1b8] sm:$0xff]
    %v1535 = vld [vmem:[#allocation8 + $0x1c0] sm:$0xff]
    %v1536 = vld [vmem:[#allocation8 + $0x1c8] sm:$0xff]
    %v1537 = vld [vmem:[#allocation8 + $0x1d0] sm:$0xff]
    %v1538 = vld [vmem:[#allocation8 + $0x1d8] sm:$0xff]
    %v1539 = vld [vmem:[#allocation8 + $0x1e0] sm:$0xff]
    %v1540 = vld [vmem:[#allocation8 + $0x1e8] sm:$0xff]
    %v1541 = vld [vmem:[#allocation8 + $0x1f0] sm:$0xff]
    %v1542 = vld [vmem:[#allocation8 + $0x1f8] sm:$0xff]
    %v1543 = vld [vmem:[#allocation8 + $0x200] sm:$0xff]
    %v1544 = vld [vmem:[#allocation8 + $0x208] sm:$0xff]
    %v1545 = vld [vmem:[#allocation8 + $0x210] sm:$0xff]
    %v1546 = vld [vmem:[#allocation8 + $0x218] sm:$0xff]
    %v1547 = vld [vmem:[#allocation8 + $0x220] sm:$0xff]
    %v1548 = vld [vmem:[#allocation8 + $0x228] sm:$0xff]
    %v1549 = vld [vmem:[#allocation8 + $0x230] sm:$0xff]
    %v1550 = vld [vmem:[#allocation8 + $0x238] sm:$0xff]
    %v1551 = vld [vmem:[#allocation8 + $0x240] sm:$0xff]
    %v1552 = vld [vmem:[#allocation8 + $0x248] sm:$0xff]
    %v1553 = vld [vmem:[#allocation8 + $0x250] sm:$0xff]
    %v1554 = vld [vmem:[#allocation8 + $0x258] sm:$0xff]
    %v1555 = vld [vmem:[#allocation8 + $0x260] sm:$0xff]
    %v1556 = vld [vmem:[#allocation8 + $0x268] sm:$0xff]
    %v1557 = vld [vmem:[#allocation8 + $0x270] sm:$0xff]
    %v1558 = vld [vmem:[#allocation8 + $0x278] sm:$0xff]
    %v1559 = vld [vmem:[#allocation8 + $0x280] sm:$0xff]
    %v1560 = vld [vmem:[#allocation8 + $0x288] sm:$0xff]
    %v1561 = vld [vmem:[#allocation8 + $0x290] sm:$0xff]
    %v1562 = vld [vmem:[#allocation8 + $0x298] sm:$0xff]
    %v1563 = vld [vmem:[#allocation8 + $0x2a0] sm:$0xff]
    %v1564 = vld [vmem:[#allocation8 + $0x2a8] sm:$0xff]
    %v1565 = vld [vmem:[#allocation8 + $0x2b0] sm:$0xff]
    %v1566 = vld [vmem:[#allocation8 + $0x2b8] sm:$0xff]
    %v1567 = vld [vmem:[#allocation8 + $0x2c0] sm:$0xff]
    %v1568 = vld [vmem:[#allocation8 + $0x2c8] sm:$0xff]
    %v1569 = vld [vmem:[#allocation8 + $0x2d0] sm:$0xff]
    %v1570 = vld [vmem:[#allocation8 + $0x2d8] sm:$0xff]
    %v1571 = vld [vmem:[#allocation8 + $0x2e0] sm:$0xff]
    %v1572 = vld [vmem:[#allocation8 + $0x2e8] sm:$0xff]
    %v1573 = vld [vmem:[#allocation8 + $0x2f0] sm:$0xff]
    %v1574 = vld [vmem:[#allocation8 + $0x2f8] sm:$0xff]
    %v1575 = vld [vmem:[%s9] sm:$0x3f]
    %v1577 = vlaneseq
    %v1578 = vshrl.u32 %v1577, 7
    %v1579 = vsub.s32 0, %v1578
    %v1580 = vrot.slane %v1575, %v1579
    %v1581 = vlaneseq
    %v1582 = vshrl.u32 %v1581, 7
    %v1583 = vsub.s32 1, %v1582
    %v1584 = vrot.slane %v1575, %v1583
    %v1585 = vlaneseq
    %v1586 = vshrl.u32 %v1585, 7
    %v1587 = vsub.s32 2, %v1586
    %v1588 = vrot.slane %v1575, %v1587
    %v1589 = vlaneseq
    %v1590 = vshrl.u32 %v1589, 7
    %v1591 = vsub.s32 3, %v1590
    %v1592 = vrot.slane %v1575, %v1591
    %v1593 = vlaneseq
    %v1594 = vshrl.u32 %v1593, 7
    %v1595 = vsub.s32 4, %v1594
    %v1596 = vrot.slane %v1575, %v1595
    %v1597 = vlaneseq
    %v1598 = vshrl.u32 %v1597, 7
    %v1599 = vsub.s32 5, %v1598
    %v1600 = vrot.slane %v1575, %v1599
    %v1703 = vunpack.c.l.b16 %v1479
    %v1704 = vunpack.c.h.b16 %v1479
    %v1705 = vunpack.c.l.b16 %v1480
    %v1706 = vunpack.c.h.b16 %v1480
    %v1707 = vunpack.c.l.b16 %v1481
    %v1708 = vunpack.c.h.b16 %v1481
    %v1709 = vunpack.c.l.b16 %v1482
    %v1710 = vunpack.c.h.b16 %v1482
    %v1711 = vunpack.c.l.b16 %v1483
    %v1712 = vunpack.c.h.b16 %v1483
    %v1713 = vunpack.c.l.b16 %v1484
    %v1714 = vunpack.c.h.b16 %v1484
    %v1715 = vunpack.c.l.b16 %v1485
    %v1716 = vunpack.c.h.b16 %v1485
    %v1717 = vunpack.c.l.b16 %v1486
    %v1718 = vunpack.c.h.b16 %v1486
    %v1719 = vunpack.c.l.b16 %v1487
    %v1720 = vunpack.c.h.b16 %v1487
    %v1721 = vunpack.c.l.b16 %v1488
    %v1722 = vunpack.c.h.b16 %v1488
    %v1723 = vunpack.c.l.b16 %v1489
    %v1724 = vunpack.c.h.b16 %v1489
    %v1725 = vunpack.c.l.b16 %v1490
    %v1726 = vunpack.c.h.b16 %v1490
    %v1727 = vunpack.c.l.b16 %v1491
    %v1728 = vunpack.c.h.b16 %v1491
    %v1729 = vunpack.c.l.b16 %v1492
    %v1730 = vunpack.c.h.b16 %v1492
    %v1731 = vunpack.c.l.b16 %v1493
    %v1732 = vunpack.c.h.b16 %v1493
    %v1733 = vunpack.c.l.b16 %v1494
    %v1734 = vunpack.c.h.b16 %v1494
    %v1735 = vunpack.c.l.b16 %v1495
    %v1736 = vunpack.c.h.b16 %v1495
    %v1737 = vunpack.c.l.b16 %v1496
    %v1738 = vunpack.c.h.b16 %v1496
    %v1739 = vunpack.c.l.b16 %v1497
    %v1740 = vunpack.c.h.b16 %v1497
    %v1741 = vunpack.c.l.b16 %v1498
    %v1742 = vunpack.c.h.b16 %v1498
    %v1743 = vunpack.c.l.b16 %v1499
    %v1744 = vunpack.c.h.b16 %v1499
    %v1745 = vunpack.c.l.b16 %v1500
    %v1746 = vunpack.c.h.b16 %v1500
    %v1747 = vunpack.c.l.b16 %v1501
    %v1748 = vunpack.c.h.b16 %v1501
    %v1749 = vunpack.c.l.b16 %v1502
    %v1750 = vunpack.c.h.b16 %v1502
    %v1751 = vunpack.c.l.b16 %v1503
    %v1752 = vunpack.c.h.b16 %v1503
    %v1753 = vunpack.c.l.b16 %v1504
    %v1754 = vunpack.c.h.b16 %v1504
    %v1755 = vunpack.c.l.b16 %v1505
    %v1756 = vunpack.c.h.b16 %v1505
    %v1757 = vunpack.c.l.b16 %v1506
    %v1758 = vunpack.c.h.b16 %v1506
    %v1759 = vunpack.c.l.b16 %v1507
    %v1760 = vunpack.c.h.b16 %v1507
    %v1761 = vunpack.c.l.b16 %v1508
    %v1762 = vunpack.c.h.b16 %v1508
    %v1763 = vunpack.c.l.b16 %v1509
    %v1764 = vunpack.c.h.b16 %v1509
    %v1765 = vunpack.c.l.b16 %v1510
    %v1766 = vunpack.c.h.b16 %v1510
    %v1767 = vunpack.c.l.b16 %v1511
    %v1768 = vunpack.c.h.b16 %v1511
    %v1769 = vunpack.c.l.b16 %v1512
    %v1770 = vunpack.c.h.b16 %v1512
    %v1771 = vunpack.c.l.b16 %v1513
    %v1772 = vunpack.c.h.b16 %v1513
    %v1773 = vunpack.c.l.b16 %v1514
    %v1774 = vunpack.c.h.b16 %v1514
    %v1775 = vunpack.c.l.b16 %v1515
    %v1776 = vunpack.c.h.b16 %v1515
    %v1777 = vunpack.c.l.b16 %v1516
    %v1778 = vunpack.c.h.b16 %v1516
    %v1779 = vunpack.c.l.b16 %v1517
    %v1780 = vunpack.c.h.b16 %v1517
    %v1781 = vunpack.c.l.b16 %v1518
    %v1782 = vunpack.c.h.b16 %v1518
    %v1783 = vunpack.c.l.b16 %v1519
    %v1784 = vunpack.c.h.b16 %v1519
    %v1785 = vunpack.c.l.b16 %v1520
    %v1786 = vunpack.c.h.b16 %v1520
    %v1787 = vunpack.c.l.b16 %v1521
    %v1788 = vunpack.c.h.b16 %v1521
    %v1789 = vunpack.c.l.b16 %v1522
    %v1790 = vunpack.c.h.b16 %v1522
    %v1791 = vunpack.c.l.b16 %v1523
    %v1792 = vunpack.c.h.b16 %v1523
    %v1793 = vunpack.c.l.b16 %v1524
    %v1794 = vunpack.c.h.b16 %v1524
    %v1795 = vunpack.c.l.b16 %v1525
    %v1796 = vunpack.c.h.b16 %v1525
    %v1797 = vunpack.c.l.b16 %v1526
    %v1798 = vunpack.c.h.b16 %v1526
    %v1799 = vunpack.c.l.b16 %v1527
    %v1800 = vunpack.c.h.b16 %v1527
    %v1801 = vunpack.c.l.b16 %v1528
    %v1802 = vunpack.c.h.b16 %v1528
    %v1803 = vunpack.c.l.b16 %v1529
    %v1804 = vunpack.c.h.b16 %v1529
    %v1805 = vunpack.c.l.b16 %v1530
    %v1806 = vunpack.c.h.b16 %v1530
    %v1807 = vunpack.c.l.b16 %v1531
    %v1808 = vunpack.c.h.b16 %v1531
    %v1809 = vunpack.c.l.b16 %v1532
    %v1810 = vunpack.c.h.b16 %v1532
    %v1811 = vunpack.c.l.b16 %v1533
    %v1812 = vunpack.c.h.b16 %v1533
    %v1813 = vunpack.c.l.b16 %v1534
    %v1814 = vunpack.c.h.b16 %v1534
    %v1815 = vunpack.c.l.b16 %v1535
    %v1816 = vunpack.c.h.b16 %v1535
    %v1817 = vunpack.c.l.b16 %v1536
    %v1818 = vunpack.c.h.b16 %v1536
    %v1819 = vunpack.c.l.b16 %v1537
    %v1820 = vunpack.c.h.b16 %v1537
    %v1821 = vunpack.c.l.b16 %v1538
    %v1822 = vunpack.c.h.b16 %v1538
    %v1823 = vunpack.c.l.b16 %v1539
    %v1824 = vunpack.c.h.b16 %v1539
    %v1825 = vunpack.c.l.b16 %v1540
    %v1826 = vunpack.c.h.b16 %v1540
    %v1827 = vunpack.c.l.b16 %v1541
    %v1828 = vunpack.c.h.b16 %v1541
    %v1829 = vunpack.c.l.b16 %v1542
    %v1830 = vunpack.c.h.b16 %v1542
    %v1831 = vunpack.c.l.b16 %v1543
    %v1832 = vunpack.c.h.b16 %v1543
    %v1833 = vunpack.c.l.b16 %v1544
    %v1834 = vunpack.c.h.b16 %v1544
    %v1835 = vunpack.c.l.b16 %v1545
    %v1836 = vunpack.c.h.b16 %v1545
    %v1837 = vunpack.c.l.b16 %v1546
    %v1838 = vunpack.c.h.b16 %v1546
    %v1839 = vunpack.c.l.b16 %v1547
    %v1840 = vunpack.c.h.b16 %v1547
    %v1841 = vunpack.c.l.b16 %v1548
    %v1842 = vunpack.c.h.b16 %v1548
    %v1843 = vunpack.c.l.b16 %v1549
    %v1844 = vunpack.c.h.b16 %v1549
    %v1845 = vunpack.c.l.b16 %v1550
    %v1846 = vunpack.c.h.b16 %v1550
    %v1847 = vunpack.c.l.b16 %v1551
    %v1848 = vunpack.c.h.b16 %v1551
    %v1849 = vunpack.c.l.b16 %v1552
    %v1850 = vunpack.c.h.b16 %v1552
    %v1851 = vunpack.c.l.b16 %v1553
    %v1852 = vunpack.c.h.b16 %v1553
    %v1853 = vunpack.c.l.b16 %v1554
    %v1854 = vunpack.c.h.b16 %v1554
    %v1855 = vunpack.c.l.b16 %v1555
    %v1856 = vunpack.c.h.b16 %v1555
    %v1857 = vunpack.c.l.b16 %v1556
    %v1858 = vunpack.c.h.b16 %v1556
    %v1859 = vunpack.c.l.b16 %v1557
    %v1860 = vunpack.c.h.b16 %v1557
    %v1861 = vunpack.c.l.b16 %v1558
    %v1862 = vunpack.c.h.b16 %v1558
    %v1863 = vunpack.c.l.b16 %v1559
    %v1864 = vunpack.c.h.b16 %v1559
    %v1865 = vunpack.c.l.b16 %v1560
    %v1866 = vunpack.c.h.b16 %v1560
    %v1867 = vunpack.c.l.b16 %v1561
    %v1868 = vunpack.c.h.b16 %v1561
    %v1869 = vunpack.c.l.b16 %v1562
    %v1870 = vunpack.c.h.b16 %v1562
    %v1871 = vunpack.c.l.b16 %v1563
    %v1872 = vunpack.c.h.b16 %v1563
    %v1873 = vunpack.c.l.b16 %v1564
    %v1874 = vunpack.c.h.b16 %v1564
    %v1875 = vunpack.c.l.b16 %v1565
    %v1876 = vunpack.c.h.b16 %v1565
    %v1877 = vunpack.c.l.b16 %v1566
    %v1878 = vunpack.c.h.b16 %v1566
    %v1879 = vunpack.c.l.b16 %v1567
    %v1880 = vunpack.c.h.b16 %v1567
    %v1881 = vunpack.c.l.b16 %v1568
    %v1882 = vunpack.c.h.b16 %v1568
    %v1883 = vunpack.c.l.b16 %v1569
    %v1884 = vunpack.c.h.b16 %v1569
    %v1885 = vunpack.c.l.b16 %v1570
    %v1886 = vunpack.c.h.b16 %v1570
    %v1887 = vunpack.c.l.b16 %v1571
    %v1888 = vunpack.c.h.b16 %v1571
    %v1889 = vunpack.c.l.b16 %v1572
    %v1890 = vunpack.c.h.b16 %v1572
    %v1891 = vunpack.c.l.b16 %v1573
    %v1892 = vunpack.c.h.b16 %v1573
    %v1893 = vunpack.c.l.b16 %v1574
    %v1894 = vunpack.c.h.b16 %v1574
    %v1895 = vpack.c.b16 %v1709, %v1703
    %v1896 = vpack.c.b16 %v1710, %v1704
    %v1897 = vpack.c.b16 %v1711, %v1705
    %v1898 = vpack.c.b16 %v1712, %v1706
    %v1899 = vpack.c.b16 %v1713, %v1707
    %v1900 = vpack.c.b16 %v1714, %v1708
    %v1901 = vpack.c.b16 %v1721, %v1715
    %v1902 = vpack.c.b16 %v1722, %v1716
    %v1903 = vpack.c.b16 %v1723, %v1717
    %v1904 = vpack.c.b16 %v1724, %v1718
    %v1905 = vpack.c.b16 %v1725, %v1719
    %v1906 = vpack.c.b16 %v1726, %v1720
    %v1907 = vpack.c.b16 %v1733, %v1727
    %v1908 = vpack.c.b16 %v1734, %v1728
    %v1909 = vpack.c.b16 %v1735, %v1729
    %v1910 = vpack.c.b16 %v1736, %v1730
    %v1911 = vpack.c.b16 %v1737, %v1731
    %v1912 = vpack.c.b16 %v1738, %v1732
    %v1913 = vpack.c.b16 %v1745, %v1739
    %v1914 = vpack.c.b16 %v1746, %v1740
    %v1915 = vpack.c.b16 %v1747, %v1741
    %v1916 = vpack.c.b16 %v1748, %v1742
    %v1917 = vpack.c.b16 %v1749, %v1743
    %v1918 = vpack.c.b16 %v1750, %v1744
    %v1919 = vpack.c.b16 %v1757, %v1751
    %v1920 = vpack.c.b16 %v1758, %v1752
    %v1921 = vpack.c.b16 %v1759, %v1753
    %v1922 = vpack.c.b16 %v1760, %v1754
    %v1923 = vpack.c.b16 %v1761, %v1755
    %v1924 = vpack.c.b16 %v1762, %v1756
    %v1925 = vpack.c.b16 %v1769, %v1763
    %v1926 = vpack.c.b16 %v1770, %v1764
    %v1927 = vpack.c.b16 %v1771, %v1765
    %v1928 = vpack.c.b16 %v1772, %v1766
    %v1929 = vpack.c.b16 %v1773, %v1767
    %v1930 = vpack.c.b16 %v1774, %v1768
    %v1931 = vpack.c.b16 %v1781, %v1775
    %v1932 = vpack.c.b16 %v1782, %v1776
    %v1933 = vpack.c.b16 %v1783, %v1777
    %v1934 = vpack.c.b16 %v1784, %v1778
    %v1935 = vpack.c.b16 %v1785, %v1779
    %v1936 = vpack.c.b16 %v1786, %v1780
    %v1937 = vpack.c.b16 %v1793, %v1787
    %v1938 = vpack.c.b16 %v1794, %v1788
    %v1939 = vpack.c.b16 %v1795, %v1789
    %v1940 = vpack.c.b16 %v1796, %v1790
    %v1941 = vpack.c.b16 %v1797, %v1791
    %v1942 = vpack.c.b16 %v1798, %v1792
    %v1943 = vpack.c.b16 %v1805, %v1799
    %v1944 = vpack.c.b16 %v1806, %v1800
    %v1945 = vpack.c.b16 %v1807, %v1801
    %v1946 = vpack.c.b16 %v1808, %v1802
    %v1947 = vpack.c.b16 %v1809, %v1803
    %v1948 = vpack.c.b16 %v1810, %v1804
    %v1949 = vpack.c.b16 %v1817, %v1811
    %v1950 = vpack.c.b16 %v1818, %v1812
    %v1951 = vpack.c.b16 %v1819, %v1813
    %v1952 = vpack.c.b16 %v1820, %v1814
    %v1953 = vpack.c.b16 %v1821, %v1815
    %v1954 = vpack.c.b16 %v1822, %v1816
    %v1955 = vpack.c.b16 %v1829, %v1823
    %v1956 = vpack.c.b16 %v1830, %v1824
    %v1957 = vpack.c.b16 %v1831, %v1825
    %v1958 = vpack.c.b16 %v1832, %v1826
    %v1959 = vpack.c.b16 %v1833, %v1827
    %v1960 = vpack.c.b16 %v1834, %v1828
    %v1961 = vpack.c.b16 %v1841, %v1835
    %v1962 = vpack.c.b16 %v1842, %v1836
    %v1963 = vpack.c.b16 %v1843, %v1837
    %v1964 = vpack.c.b16 %v1844, %v1838
    %v1965 = vpack.c.b16 %v1845, %v1839
    %v1966 = vpack.c.b16 %v1846, %v1840
    %v1967 = vpack.c.b16 %v1853, %v1847
    %v1968 = vpack.c.b16 %v1854, %v1848
    %v1969 = vpack.c.b16 %v1855, %v1849
    %v1970 = vpack.c.b16 %v1856, %v1850
    %v1971 = vpack.c.b16 %v1857, %v1851
    %v1972 = vpack.c.b16 %v1858, %v1852
    %v1973 = vpack.c.b16 %v1865, %v1859
    %v1974 = vpack.c.b16 %v1866, %v1860
    %v1975 = vpack.c.b16 %v1867, %v1861
    %v1976 = vpack.c.b16 %v1868, %v1862
    %v1977 = vpack.c.b16 %v1869, %v1863
    %v1978 = vpack.c.b16 %v1870, %v1864
    %v1979 = vpack.c.b16 %v1877, %v1871
    %v1980 = vpack.c.b16 %v1878, %v1872
    %v1981 = vpack.c.b16 %v1879, %v1873
    %v1982 = vpack.c.b16 %v1880, %v1874
    %v1983 = vpack.c.b16 %v1881, %v1875
    %v1984 = vpack.c.b16 %v1882, %v1876
    %v1985 = vpack.c.b16 %v1889, %v1883
    %v1986 = vpack.c.b16 %v1890, %v1884
    %v1987 = vpack.c.b16 %v1891, %v1885
    %v1988 = vpack.c.b16 %v1892, %v1886
    %v1989 = vpack.c.b16 %v1893, %v1887
    %v1990 = vpack.c.b16 %v1894, %v1888
    %2087 = vmatprep.subr.bf16.mxu0 %v1896
    %2088 = vmatpush1.bf16.msra.mxu0 %v1895
    %2089 = vmatprep.subr.bf16.mxu0 %v1902
    %2090 = vmatpush1.bf16.msra.mxu0 %v1901
    %2091 = vmatprep.subr.bf16.mxu0 %v1908
    %2092 = vmatpush1.bf16.msra.mxu0 %v1907
    %2093 = vmatprep.subr.bf16.mxu0 %v1914
    %2094 = vmatpush1.bf16.msra.mxu0 %v1913
    %2095 = vmatprep.subr.bf16.mxu0 %v1920
    %2096 = vmatpush1.bf16.msra.mxu0 %v1919
    %2097 = vmatprep.subr.bf16.mxu0 %v1926
    %2098 = vmatpush1.bf16.msra.mxu0 %v1925
    %2099 = vmatprep.subr.bf16.mxu0 %v1932
    %2100 = vmatpush1.bf16.msra.mxu0 %v1931
    %2101 = vmatprep.subr.bf16.mxu0 %v1938
    %2102 = vmatpush1.bf16.msra.mxu0 %v1937
    %2103 = vmatprep.subr.bf16.mxu0 %v1944
    %2104 = vmatpush1.bf16.msra.mxu0 %v1943
    %2105 = vmatprep.subr.bf16.mxu0 %v1950
    %2106 = vmatpush1.bf16.msra.mxu0 %v1949
    %2107 = vmatprep.subr.bf16.mxu0 %v1956
    %2108 = vmatpush1.bf16.msra.mxu0 %v1955
    %2109 = vmatprep.subr.bf16.mxu0 %v1962
    %2110 = vmatpush1.bf16.msra.mxu0 %v1961
    %2111 = vmatprep.subr.bf16.mxu0 %v1968
    %2112 = vmatpush1.bf16.msra.mxu0 %v1967
    %2113 = vmatprep.subr.bf16.mxu0 %v1974
    %2114 = vmatpush1.bf16.msra.mxu0 %v1973
    %2115 = vmatprep.subr.bf16.mxu0 %v1980
    %2116 = vmatpush1.bf16.msra.mxu0 %v1979
    %2117 = vmatprep.subr.bf16.mxu0 %v1986
    %2118 = vmatpush1.bf16.msra.mxu0 %v1985
    %2119 = vmatprep.mubr.bf16.mxu0 %v1478
    %2120 = vmatmul.mubr.bf16.gmra.mrb[0].mxu0 %v1477
    %v2121 = vpop.f32.mrb[0].mxu0
    %v2122 = vadd.f32 %v1580, %v2121
    %v2123 = vpop.f32.mrb[0].mxu0
    %v2124 = vadd.f32 %v1584, %v2123
    %v2125 = vpop.f32.mrb[0].mxu0
    %v2126 = vadd.f32 %v1580, %v2125
    %v2127 = vpop.f32.mrb[0].mxu0
    %v2128 = vadd.f32 %v1584, %v2127
    %2129 = vdwg.mxu0
    %2130 = vmatprep.subr.bf16.mxu0 %v1898
    %2131 = vmatpush1.bf16.msra.mxu0 %v1897
    %2132 = vmatprep.subr.bf16.mxu0 %v1904
    %2133 = vmatpush1.bf16.msra.mxu0 %v1903
    %2134 = vmatprep.subr.bf16.mxu0 %v1910
    %2135 = vmatpush1.bf16.msra.mxu0 %v1909
    %2136 = vmatprep.subr.bf16.mxu0 %v1916
    %2137 = vmatpush1.bf16.msra.mxu0 %v1915
    %2138 = vmatprep.subr.bf16.mxu0 %v1922
    %2139 = vmatpush1.bf16.msra.mxu0 %v1921
    %2140 = vmatprep.subr.bf16.mxu0 %v1928
    %2141 = vmatpush1.bf16.msra.mxu0 %v1927
    %2142 = vmatprep.subr.bf16.mxu0 %v1934
    %2143 = vmatpush1.bf16.msra.mxu0 %v1933
    %2144 = vmatprep.subr.bf16.mxu0 %v1940
    %2145 = vmatpush1.bf16.msra.mxu0 %v1939
    %2146 = vmatprep.subr.bf16.mxu0 %v1946
    %2147 = vmatpush1.bf16.msra.mxu0 %v1945
    %2148 = vmatprep.subr.bf16.mxu0 %v1952
    %2149 = vmatpush1.bf16.msra.mxu0 %v1951
    %2150 = vmatprep.subr.bf16.mxu0 %v1958
    %2151 = vmatpush1.bf16.msra.mxu0 %v1957
    %2152 = vmatprep.subr.bf16.mxu0 %v1964
    %2153 = vmatpush1.bf16.msra.mxu0 %v1963
    %2154 = vmatprep.subr.bf16.mxu0 %v1970
    %2155 = vmatpush1.bf16.msra.mxu0 %v1969
    %2156 = vmatprep.subr.bf16.mxu0 %v1976
    %2157 = vmatpush1.bf16.msra.mxu0 %v1975
    %2158 = vmatprep.subr.bf16.mxu0 %v1982
    %2159 = vmatpush1.bf16.msra.mxu0 %v1981
    %2160 = vmatprep.subr.bf16.mxu0 %v1988
    %2161 = vmatpush1.bf16.msra.mxu0 %v1987
    %2162 = vmatprep.mubr.bf16.mxu0 %v1478
    %2163 = vmatmul.mubr.bf16.gmra.mrb[0].mxu0 %v1477
    %v2164 = vpop.f32.mrb[0].mxu0
    %v2165 = vadd.f32 %v1588, %v2164
    %v2166 = vpop.f32.mrb[0].mxu0
    %v2167 = vadd.f32 %v1592, %v2166
    %v2168 = vpop.f32.mrb[0].mxu0
    %v2169 = vadd.f32 %v1588, %v2168
    %v2170 = vpop.f32.mrb[0].mxu0
    %v2171 = vadd.f32 %v1592, %v2170
    %2172 = vdwg.mxu0
    %2173 = vmatprep.subr.bf16.mxu0 %v1900
    %2174 = vmatpush1.bf16.msra.mxu0 %v1899
    %2175 = vmatprep.subr.bf16.mxu0 %v1906
    %2176 = vmatpush1.bf16.msra.mxu0 %v1905
    %2177 = vmatprep.subr.bf16.mxu0 %v1912
    %2178 = vmatpush1.bf16.msra.mxu0 %v1911
    %2179 = vmatprep.subr.bf16.mxu0 %v1918
    %2180 = vmatpush1.bf16.msra.mxu0 %v1917
    %2181 = vmatprep.subr.bf16.mxu0 %v1924
    %2182 = vmatpush1.bf16.msra.mxu0 %v1923
    %2183 = vmatprep.subr.bf16.mxu0 %v1930
    %2184 = vmatpush1.bf16.msra.mxu0 %v1929
    %2185 = vmatprep.subr.bf16.mxu0 %v1936
    %2186 = vmatpush1.bf16.msra.mxu0 %v1935
    %2187 = vmatprep.subr.bf16.mxu0 %v1942
    %2188 = vmatpush1.bf16.msra.mxu0 %v1941
    %2189 = vmatprep.subr.bf16.mxu0 %v1948
    %2190 = vmatpush1.bf16.msra.mxu0 %v1947
    %2191 = vmatprep.subr.bf16.mxu0 %v1954
    %2192 = vmatpush1.bf16.msra.mxu0 %v1953
    %2193 = vmatprep.subr.bf16.mxu0 %v1960
    %2194 = vmatpush1.bf16.msra.mxu0 %v1959
    %2195 = vmatprep.subr.bf16.mxu0 %v1966
    %2196 = vmatpush1.bf16.msra.mxu0 %v1965
    %2197 = vmatprep.subr.bf16.mxu0 %v1972
    %2198 = vmatpush1.bf16.msra.mxu0 %v1971
    %2199 = vmatprep.subr.bf16.mxu0 %v1978
    %2200 = vmatpush1.bf16.msra.mxu0 %v1977
    %2201 = vmatprep.subr.bf16.mxu0 %v1984
    %2202 = vmatpush1.bf16.msra.mxu0 %v1983
    %2203 = vmatprep.subr.bf16.mxu0 %v1990
    %2204 = vmatpush1.bf16.msra.mxu0 %v1989
    %2205 = vmatprep.mubr.bf16.mxu0 %v1478
    %2206 = vmatmul.mubr.bf16.gmra.mrb[0].mxu0 %v1477
    %v2207 = vpop.f32.mrb[0].mxu0
    %v2208 = vadd.f32 %v1596, %v2207
    %v2209 = vpop.f32.mrb[0].mxu0
    %v2210 = vadd.f32 %v1600, %v2209
    %v2211 = vpop.f32.mrb[0].mxu0
    %v2212 = vadd.f32 %v1596, %v2211
    %v2213 = vpop.f32.mrb[0].mxu0
    %v2214 = vadd.f32 %v1600, %v2213
    %2215 = vdwg.mxu0
    %2216 = vst [vmem:[#allocation10] sm:$0xff] %v2122
    %2217 = vst [vmem:[#allocation10 + $0x8] sm:$0xff] %v2124
    %2218 = vst [vmem:[#allocation10 + $0x10] sm:$0xff] %v2165
    %2219 = vst [vmem:[#allocation10 + $0x18] sm:$0xff] %v2167
    %2220 = vst [vmem:[#allocation10 + $0x20] sm:$0xff] %v2208
    %2221 = vst [vmem:[#allocation10 + $0x28] sm:$0xff] %v2210
    %2222 = vst [vmem:[#allocation10 + $0x30] sm:$0xff] %v2126
    %2223 = vst [vmem:[#allocation10 + $0x38] sm:$0xff] %v2128
    %2224 = vst [vmem:[#allocation10 + $0x40] sm:$0xff] %v2169
    %2225 = vst [vmem:[#allocation10 + $0x48] sm:$0xff] %v2171
    %2226 = vst [vmem:[#allocation10 + $0x50] sm:$0xff] %v2212
    %2227 = vst [vmem:[#allocation10 + $0x58] sm:$0xff] %v2214
    // Predicated region
    $region58: #{diffusion_fc_forward.1} parent=1 // pred_check
      _
    $region59: #{diffusion_fc_forward.1} parent=1 // pred_check_branch
      %2229 = sbr.rel (0) target = $region61
    $region60: #{diffusion_fc_forward.1} parent=1 // pred_region
      %s2231 = ssub.s32 1536, 1536
      %2232 = vsyncadd [#allocation4], %s2231
      %s2233 = sshll.u32 [#allocation10], 4
      %s2234 = int_to_ptr.vmem [resolvable:$true] %s2233
      %2239 = dma.vmem_to_hbm [thread:$0]  %s2234, 1536, %s10, [#allocation4], 768, 768, 48
    $region61: #{diffusion_fc_forward.1} parent=1 // pred_fallthru
      _
    // Predicated region
    $region62: #{diffusion_fc_forward.1} parent=1 // pred_check
      _
    $region63: #{diffusion_fc_forward.1} parent=1 // pred_check_branch
      %2241 = sbr.rel (0) target = $region65
    $region64: #{diffusion_fc_forward.1} parent=1 // pred_region
      %2242 = dma.done [#allocation4], 1536
    $region65: #{diffusion_fc_forward.1} parent=1 // pred_fallthru
      _
    %2243 = vsyncpa [#allocation3], 1
    %2244 = vsyncpa [#allocation6], 1
    %2245 = vsyncpa [#allocation9], 1
    %2246 = vsyncpa [#allocation4], 1

</llo_original>
